<compile_context>
chip_gen: v6e
topology: v6e:2x2x1
jax: 0.10.0
libtpu: 0.0.40
codegen_flags: <defaults>
</compile_context>

<pallas_src>
import functools

import numpy as np
import jax
import jax.numpy as jnp
from jax.experimental import pallas as pl
from jax.experimental.pallas import tpu as pltpu

EPS = 1e-5


def _resblock_kernel(x_ref, m_ref, v_ref, out_ref, *, N, C, H, W):
    NWC = N * W * C
    x = x_ref[...]                                            # (H, NWC) f32

    # Height-shift matrices built from iota (nothing extra DMA'd):
    #   (s_up @ y)[h] = y[h-1]  (row h=0 zeroed)   -> pairs with kernel row kh=0
    #   (s_dn @ y)[h] = y[h+1]  (row h=H-1 zeroed) -> pairs with kernel row kh=2
    ri = jax.lax.broadcasted_iota(jnp.int32, (H, H), 0)
    cj = jax.lax.broadcasted_iota(jnp.int32, (H, H), 1)
    s_up = jnp.where(cj == ri - 1, 1.0, 0.0).astype(jnp.float32)
    s_dn = jnp.where(cj == ri + 1, 1.0, 0.0).astype(jnp.float32)

    # Per-channel averaging / broadcast matrix for BatchNorm statistics:
    # avg[p, q] = 1/(N*H*W) iff lanes p and q hold the same channel.
    lp = jax.lax.broadcasted_iota(jnp.int32, (NWC, NWC), 0)
    lq = jax.lax.broadcasted_iota(jnp.int32, (NWC, NWC), 1)
    avg = jnp.where(lp % C == lq % C, 1.0 / (N * H * W), 0.0).astype(jnp.float32)

    def conv3x3(src, m_base):
        # src: (H, NWC).  m_ref[m_base + kh] couples source lane -> output lane
        # for kernel row kh; W taps / channel mixing / zero padding / batch
        # separation are all baked into that matrix.
        up = jnp.dot(s_up, src, preferred_element_type=jnp.float32)
        dn = jnp.dot(s_dn, src, preferred_element_type=jnp.float32)
        acc = jnp.dot(up, m_ref[m_base + 0], preferred_element_type=jnp.float32)
        acc = acc + jnp.dot(src, m_ref[m_base + 1], preferred_element_type=jnp.float32)
        acc = acc + jnp.dot(dn, m_ref[m_base + 2], preferred_element_type=jnp.float32)
        return acc

    def batchnorm(y, gamma_lane, beta_lane):
        # Training-mode BatchNorm2d: per-channel stats over (N, H, W), biased var.
        mean = jnp.dot(jnp.sum(y, axis=0, keepdims=True), avg,
                       preferred_element_type=jnp.float32)       # (1, NWC)
        d = y - mean
        var = jnp.dot(jnp.sum(d * d, axis=0, keepdims=True), avg,
                      preferred_element_type=jnp.float32)         # (1, NWC)
        return d * (jax.lax.rsqrt(var + EPS) * gamma_lane) + beta_lane

    # conv1 -> bn1 -> relu  (h1 stays in registers; no scratch round trip)
    h1 = conv3x3(x, 0) + v_ref[0:1, :]
    h1 = jnp.maximum(batchnorm(h1, v_ref[1:2, :], v_ref[2:3, :]), 0.0)

    # conv2 -> bn2 -> +residual -> relu
    h2 = conv3x3(h1, 3) + v_ref[3:4, :]
    h2 = batchnorm(h2, v_ref[4:5, :], v_ref[5:6, :])
    out_ref[...] = jnp.maximum(h2 + x, 0.0)


def _lane_coupling_matrices(w_oihw, N, C, W):
    """One (NWC, NWC) matrix per kernel row kh:  M[kh][p, q] is the conv weight
    connecting source lane p = (n, w_src, ci) to output lane q = (n, w_out, co);
    zero outside the 3-tap band, across images, or across the W boundary."""
    NWC = N * W * C
    lane = np.arange(NWC)
    n_of = lane // (W * C)
    w_of = (lane // C) % W
    c_of = lane % C
    dw = w_of[:, None] - w_of[None, :]                        # w_src - w_out
    valid = (n_of[:, None] == n_of[None, :]) & (np.abs(dw) <= 1)
    kw = np.clip(dw, -1, 1) + 1                               # 0..2
    ci = np.broadcast_to(c_of[:, None], (NWC, NWC))           # source channel
    co = np.broadcast_to(c_of[None, :], (NWC, NWC))           # output channel
    mats = []
    for kh in range(3):
        w_kh = w_oihw[:, :, kh, :]                            # (Cout, Cin, 3)
        mats.append(jnp.where(valid, w_kh[co, ci, kw], 0.0))
    return jnp.stack(mats, axis=0).astype(jnp.float32)        # (3, NWC, NWC)


@jax.jit
def residual_block(x_nchw, w1, b1, g1, be1, w2, b2, g2, be2):
    N, C, H, W = x_nchw.shape
    NWC = N * W * C

    # Lane-dense layout: X[h, n*W*C + w*C + c] = x[n, c, h, w]  -> (16, 128).
    x = jnp.transpose(x_nchw.astype(jnp.float32), (2, 0, 3, 1)).reshape(H, NWC)

    # Packed parameter slabs (2 DMAs total instead of 8+ tiny ones).
    m = jnp.concatenate([_lane_coupling_matrices(w1, N, C, W),
                         _lane_coupling_matrices(w2, N, C, W)], axis=0)  # (6,NWC,NWC)
    lane_c = np.arange(NWC) % C
    vecs = jnp.stack([b1[lane_c], g1[lane_c], be1[lane_c],
                      b2[lane_c], g2[lane_c], be2[lane_c]],
                     axis=0).astype(jnp.float32)                          # (6, NWC)

    kernel = functools.partial(_resblock_kernel, N=N, C=C, H=H, W=W)
    out = pl.pallas_call(
        kernel,
        out_shape=jax.ShapeDtypeStruct((H, NWC), jnp.float32),
        in_specs=[pl.BlockSpec(memory_space=pltpu.MemorySpace.VMEM)] * 3,
        out_specs=pl.BlockSpec(memory_space=pltpu.MemorySpace.VMEM),
    )(x, m, vecs)

    return jnp.transpose(out.reshape(H, N, W, C), (1, 3, 0, 2))           # NCHW


def reference(x, w1, b1, g1, be1, w2, b2, g2, be2):
    """Pure-JAX reference matching PyTorch training-mode forward."""
    def conv(x, w, b):
        y = jax.lax.conv_general_dilated(
            x, w, (1, 1), 'SAME',
            dimension_numbers=('NCHW', 'OIHW', 'NCHW'),
            precision=jax.lax.Precision.HIGHEST)
        return y + b[None, :, None, None]

    def bn(y, g, be):
        mean = jnp.mean(y, axis=(0, 2, 3), keepdims=True)
        var = jnp.mean((y - mean) ** 2, axis=(0, 2, 3), keepdims=True)
        return ((y - mean) * jax.lax.rsqrt(var + EPS)
                * g[None, :, None, None] + be[None, :, None, None])

    h = jax.nn.relu(bn(conv(x, w1, b1), g1, be1))
    h = bn(conv(h, w2, b2), g2, be2)
    return jax.nn.relu(h + x)


if __name__ == "__main__":
    key = jax.random.PRNGKey(0)
    ks = jax.random.split(key, 9)

    N, C, H, W = 2, 4, 16, 16
    x = jax.random.normal(ks[0], (N, C, H, W), jnp.float32)

    # Deterministic synthetic parameters (shapes per nn.Conv2d / nn.BatchNorm2d)
    w1 = 0.1 * jax.random.normal(ks[1], (C, C, 3, 3), jnp.float32)   # OIHW
    b1 = 0.1 * jax.random.normal(ks[2], (C,), jnp.float32)
    w2 = 0.1 * jax.random.normal(ks[3], (C, C, 3, 3), jnp.float32)
    b2 = 0.1 * jax.random.normal(ks[4], (C,), jnp.float32)
    g1 = 1.0 + 0.1 * jax.random.normal(ks[5], (C,), jnp.float32)     # bn1 weight
    be1 = 0.1 * jax.random.normal(ks[6], (C,), jnp.float32)          # bn1 bias
    g2 = 1.0 + 0.1 * jax.random.normal(ks[7], (C,), jnp.float32)     # bn2 weight
    be2 = 0.1 * jax.random.normal(ks[8], (C,), jnp.float32)          # bn2 bias

    out = residual_block(x, w1, b1, g1, be1, w2, b2, g2, be2)
    out = jax.block_until_ready(out)

    ref = jax.block_until_ready(reference(x, w1, b1, g1, be1, w2, b2, g2, be2))
    assert out.shape == ref.shape == (N, C, H, W)
    # Tolerance leaves headroom for MXU default-precision f32 matmul passes.
    assert jnp.allclose(out, ref, atol=1e-2, rtol=2e-2), (
        float(jnp.max(jnp.abs(out - ref))))

    # TODO(synk): PyTorch training-mode BN also updates running_mean/var as a
    # stateful side effect; that bookkeeping does not affect the returned
    # tensor and is not reproduced here.
    print("KERNEL_OK")
</pallas_src>

<mosaic_0001>
module attributes {stable_mosaic.version = 11 : i64} {
  func.func @_resblock_kernel(%arg0: memref<16x128xf32, #tpu.memory_space<vmem>>, %arg1: memref<6x128x128xf32, #tpu.memory_space<vmem>>, %arg2: memref<6x128xf32, #tpu.memory_space<vmem>>, %arg3: memref<16x128xf32, #tpu.memory_space<vmem>>) attributes {dimension_semantics = [], scalar_prefetch = 0 : i64, scratch_operands = 0 : i64, tpu.core_type = #tpu.core_type<tc>} {
    %c0 = arith.constant 0 : index
    %c0_0 = arith.constant 0 : index
    %0 = vector.load %arg0[%c0, %c0_0] : memref<16x128xf32, #tpu.memory_space<vmem>>, vector<16x128xf32>
    %1 = tpu.iota {dimensions = array<i32: 0>} : vector<16x16xi32>
    %2 = tpu.iota {dimensions = array<i32: 1>} : vector<16x16xi32>
    %c1_i32 = arith.constant 1 : i32
    %3 = vector.broadcast %c1_i32 : i32 to vector<16x16xi32>
    %4 = arith.subi %1, %3 : vector<16x16xi32>
    %5 = arith.cmpi eq, %2, %4 : vector<16x16xi32>
    %cst = arith.constant 1.000000e+00 : f32
    %cst_1 = arith.constant 0.000000e+00 : f32
    %6 = vector.broadcast %cst : f32 to vector<16x16xf32>
    %7 = vector.broadcast %cst_1 : f32 to vector<16x16xf32>
    %8 = arith.select %5, %6, %7 : vector<16x16xi1>, vector<16x16xf32>
    %c1_i32_2 = arith.constant 1 : i32
    %9 = vector.broadcast %c1_i32_2 : i32 to vector<16x16xi32>
    %10 = arith.addi %1, %9 : vector<16x16xi32>
    %11 = arith.cmpi eq, %2, %10 : vector<16x16xi32>
    %cst_3 = arith.constant 1.000000e+00 : f32
    %cst_4 = arith.constant 0.000000e+00 : f32
    %12 = vector.broadcast %cst_3 : f32 to vector<16x16xf32>
    %13 = vector.broadcast %cst_4 : f32 to vector<16x16xf32>
    %14 = arith.select %11, %12, %13 : vector<16x16xi1>, vector<16x16xf32>
    %15 = tpu.iota {dimensions = array<i32: 0>} : vector<128x128xi32>
    %16 = tpu.iota {dimensions = array<i32: 1>} : vector<128x128xi32>
    %c4_i32 = arith.constant 4 : i32
    %c0_i32 = arith.constant 0 : i32
    %17 = arith.cmpi eq, %c4_i32, %c0_i32 : i32
    %c1_i32_5 = arith.constant 1 : i32
    %18 = arith.select %17, %c1_i32_5, %c4_i32 : i32
    %19 = vector.broadcast %18 : i32 to vector<128x128xi32>
    %20 = arith.remsi %15, %19 : vector<128x128xi32>
    %c0_i32_6 = arith.constant 0 : i32
    %21 = vector.broadcast %c0_i32_6 : i32 to vector<128x128xi32>
    %22 = arith.cmpi ne, %20, %21 : vector<128x128xi32>
    %c0_i32_7 = arith.constant 0 : i32
    %23 = vector.broadcast %c0_i32_7 : i32 to vector<128x128xi32>
    %24 = arith.cmpi slt, %20, %23 : vector<128x128xi32>
    %c0_i32_8 = arith.constant 0 : i32
    %25 = arith.cmpi slt, %18, %c0_i32_8 : i32
    %26 = vector.broadcast %25 : i1 to vector<128x128xi1>
    %27 = vector.broadcast %26 : vector<128x128xi1> to vector<128x128xi1>
    %28 = arith.xori %24, %27 : vector<128x128xi1>
    %29 = arith.andi %28, %22 : vector<128x128xi1>
    %30 = vector.broadcast %18 : i32 to vector<128x128xi32>
    %31 = arith.addi %20, %30 : vector<128x128xi32>
    %32 = arith.select %29, %31, %20 : vector<128x128xi1>, vector<128x128xi32>
    %c4_i32_9 = arith.constant 4 : i32
    %c0_i32_10 = arith.constant 0 : i32
    %33 = arith.cmpi eq, %c4_i32_9, %c0_i32_10 : i32
    %c1_i32_11 = arith.constant 1 : i32
    %34 = arith.select %33, %c1_i32_11, %c4_i32_9 : i32
    %35 = vector.broadcast %34 : i32 to vector<128x128xi32>
    %36 = arith.remsi %16, %35 : vector<128x128xi32>
    %c0_i32_12 = arith.constant 0 : i32
    %37 = vector.broadcast %c0_i32_12 : i32 to vector<128x128xi32>
    %38 = arith.cmpi ne, %36, %37 : vector<128x128xi32>
    %c0_i32_13 = arith.constant 0 : i32
    %39 = vector.broadcast %c0_i32_13 : i32 to vector<128x128xi32>
    %40 = arith.cmpi slt, %36, %39 : vector<128x128xi32>
    %c0_i32_14 = arith.constant 0 : i32
    %41 = arith.cmpi slt, %34, %c0_i32_14 : i32
    %42 = vector.broadcast %41 : i1 to vector<128x128xi1>
    %43 = vector.broadcast %42 : vector<128x128xi1> to vector<128x128xi1>
    %44 = arith.xori %40, %43 : vector<128x128xi1>
    %45 = arith.andi %44, %38 : vector<128x128xi1>
    %46 = vector.broadcast %34 : i32 to vector<128x128xi32>
    %47 = arith.addi %36, %46 : vector<128x128xi32>
    %48 = arith.select %45, %47, %36 : vector<128x128xi1>, vector<128x128xi32>
    %49 = arith.cmpi eq, %32, %48 : vector<128x128xi32>
    %cst_15 = arith.constant 0.001953125 : f32
    %cst_16 = arith.constant 0.000000e+00 : f32
    %50 = vector.broadcast %cst_15 : f32 to vector<128x128xf32>
    %51 = vector.broadcast %cst_16 : f32 to vector<128x128xf32>
    %52 = arith.select %49, %50, %51 : vector<128x128xi1>, vector<128x128xf32>
    %cst_17 = arith.constant dense<0.000000e+00> : vector<16x128xf32>
    %53 = tpu.matmul %8, %0, %cst_17 {dimension_numbers = #tpu.dot_dimension_numbers<[1], [0], [0], [1], [0, 0, 1, 1], [], []>} : vector<16x16xf32>, vector<16x128xf32>, vector<16x128xf32> -> vector<16x128xf32>
    %cst_18 = arith.constant dense<0.000000e+00> : vector<16x128xf32>
    %54 = tpu.matmul %14, %0, %cst_18 {dimension_numbers = #tpu.dot_dimension_numbers<[1], [0], [0], [1], [0, 0, 1, 1], [], []>} : vector<16x16xf32>, vector<16x128xf32>, vector<16x128xf32> -> vector<16x128xf32>
    %c0_19 = arith.constant 0 : index
    %c0_20 = arith.constant 0 : index
    %c0_21 = arith.constant 0 : index
    %55 = vector.load %arg1[%c0_19, %c0_20, %c0_21] : memref<6x128x128xf32, #tpu.memory_space<vmem>>, vector<1x128x128xf32>
    %56 = vector.shape_cast %55 : vector<1x128x128xf32> to vector<128x128xf32>
    %cst_22 = arith.constant dense<0.000000e+00> : vector<16x128xf32>
    %57 = tpu.matmul %53, %56, %cst_22 {dimension_numbers = #tpu.dot_dimension_numbers<[1], [0], [0], [1], [0, 0, 1, 1], [], []>} : vector<16x128xf32>, vector<128x128xf32>, vector<16x128xf32> -> vector<16x128xf32>
    %c1 = arith.constant 1 : index
    %c0_23 = arith.constant 0 : index
    %c0_24 = arith.constant 0 : index
    %58 = vector.load %arg1[%c1, %c0_23, %c0_24] : memref<6x128x128xf32, #tpu.memory_space<vmem>>, vector<1x128x128xf32>
    %59 = vector.shape_cast %58 : vector<1x128x128xf32> to vector<128x128xf32>
    %cst_25 = arith.constant dense<0.000000e+00> : vector<16x128xf32>
    %60 = tpu.matmul %0, %59, %cst_25 {dimension_numbers = #tpu.dot_dimension_numbers<[1], [0], [0], [1], [0, 0, 1, 1], [], []>} : vector<16x128xf32>, vector<128x128xf32>, vector<16x128xf32> -> vector<16x128xf32>
    %61 = arith.addf %57, %60 : vector<16x128xf32>
    %c2 = arith.constant 2 : index
    %c0_26 = arith.constant 0 : index
    %c0_27 = arith.constant 0 : index
    %62 = vector.load %arg1[%c2, %c0_26, %c0_27] : memref<6x128x128xf32, #tpu.memory_space<vmem>>, vector<1x128x128xf32>
    %63 = vector.shape_cast %62 : vector<1x128x128xf32> to vector<128x128xf32>
    %cst_28 = arith.constant dense<0.000000e+00> : vector<16x128xf32>
    %64 = tpu.matmul %54, %63, %cst_28 {dimension_numbers = #tpu.dot_dimension_numbers<[1], [0], [0], [1], [0, 0, 1, 1], [], []>} : vector<16x128xf32>, vector<128x128xf32>, vector<16x128xf32> -> vector<16x128xf32>
    %65 = arith.addf %61, %64 : vector<16x128xf32>
    %c0_29 = arith.constant 0 : index
    %c0_30 = arith.constant 0 : index
    %66 = vector.load %arg2[%c0_29, %c0_30] : memref<6x128xf32, #tpu.memory_space<vmem>>, vector<1x128xf32>
    %67 = vector.broadcast %66 : vector<1x128xf32> to vector<16x128xf32>
    %68 = arith.addf %65, %67 : vector<16x128xf32>
    %c1_31 = arith.constant 1 : index
    %c0_32 = arith.constant 0 : index
    %69 = vector.load %arg2[%c1_31, %c0_32] : memref<6x128xf32, #tpu.memory_space<vmem>>, vector<1x128xf32>
    %c2_33 = arith.constant 2 : index
    %c0_34 = arith.constant 0 : index
    %70 = vector.load %arg2[%c2_33, %c0_34] : memref<6x128xf32, #tpu.memory_space<vmem>>, vector<1x128xf32>
    %cst_35 = arith.constant dense<0.000000e+00> : vector<128xf32>
    %71 = vector.multi_reduction <add>, %68, %cst_35 [0] : vector<16x128xf32> to vector<128xf32>
    %72 = vector.shape_cast %71 : vector<128xf32> to vector<1x128xf32>
    %cst_36 = arith.constant dense<0.000000e+00> : vector<1x128xf32>
    %73 = tpu.matmul %72, %52, %cst_36 {dimension_numbers = #tpu.dot_dimension_numbers<[1], [0], [0], [1], [0, 0, 1, 1], [], []>} : vector<1x128xf32>, vector<128x128xf32>, vector<1x128xf32> -> vector<1x128xf32>
    %74 = vector.broadcast %73 : vector<1x128xf32> to vector<16x128xf32>
    %75 = arith.subf %68, %74 : vector<16x128xf32>
    %76 = arith.mulf %75, %75 : vector<16x128xf32>
    %cst_37 = arith.constant dense<0.000000e+00> : vector<128xf32>
    %77 = vector.multi_reduction <add>, %76, %cst_37 [0] : vector<16x128xf32> to vector<128xf32>
    %78 = vector.shape_cast %77 : vector<128xf32> to vector<1x128xf32>
    %cst_38 = arith.constant dense<0.000000e+00> : vector<1x128xf32>
    %79 = tpu.matmul %78, %52, %cst_38 {dimension_numbers = #tpu.dot_dimension_numbers<[1], [0], [0], [1], [0, 0, 1, 1], [], []>} : vector<1x128xf32>, vector<128x128xf32>, vector<1x128xf32> -> vector<1x128xf32>
    %cst_39 = arith.constant 9.99999974E-6 : f32
    %80 = vector.broadcast %cst_39 : f32 to vector<1x128xf32>
    %81 = arith.addf %79, %80 : vector<1x128xf32>
    %82 = math.rsqrt %81 : vector<1x128xf32>
    %83 = arith.mulf %82, %69 : vector<1x128xf32>
    %84 = vector.broadcast %83 : vector<1x128xf32> to vector<16x128xf32>
    %85 = arith.mulf %75, %84 : vector<16x128xf32>
    %86 = vector.broadcast %70 : vector<1x128xf32> to vector<16x128xf32>
    %87 = arith.addf %85, %86 : vector<16x128xf32>
    %cst_40 = arith.constant 0.000000e+00 : f32
    %88 = vector.broadcast %cst_40 : f32 to vector<16x128xf32>
    %89 = arith.maximumf %87, %88 : vector<16x128xf32>
    %cst_41 = arith.constant dense<0.000000e+00> : vector<16x128xf32>
    %90 = tpu.matmul %8, %89, %cst_41 {dimension_numbers = #tpu.dot_dimension_numbers<[1], [0], [0], [1], [0, 0, 1, 1], [], []>} : vector<16x16xf32>, vector<16x128xf32>, vector<16x128xf32> -> vector<16x128xf32>
    %cst_42 = arith.constant dense<0.000000e+00> : vector<16x128xf32>
    %91 = tpu.matmul %14, %89, %cst_42 {dimension_numbers = #tpu.dot_dimension_numbers<[1], [0], [0], [1], [0, 0, 1, 1], [], []>} : vector<16x16xf32>, vector<16x128xf32>, vector<16x128xf32> -> vector<16x128xf32>
    %c3 = arith.constant 3 : index
    %c0_43 = arith.constant 0 : index
    %c0_44 = arith.constant 0 : index
    %92 = vector.load %arg1[%c3, %c0_43, %c0_44] : memref<6x128x128xf32, #tpu.memory_space<vmem>>, vector<1x128x128xf32>
    %93 = vector.shape_cast %92 : vector<1x128x128xf32> to vector<128x128xf32>
    %cst_45 = arith.constant dense<0.000000e+00> : vector<16x128xf32>
    %94 = tpu.matmul %90, %93, %cst_45 {dimension_numbers = #tpu.dot_dimension_numbers<[1], [0], [0], [1], [0, 0, 1, 1], [], []>} : vector<16x128xf32>, vector<128x128xf32>, vector<16x128xf32> -> vector<16x128xf32>
    %c4 = arith.constant 4 : index
    %c0_46 = arith.constant 0 : index
    %c0_47 = arith.constant 0 : index
    %95 = vector.load %arg1[%c4, %c0_46, %c0_47] : memref<6x128x128xf32, #tpu.memory_space<vmem>>, vector<1x128x128xf32>
    %96 = vector.shape_cast %95 : vector<1x128x128xf32> to vector<128x128xf32>
    %cst_48 = arith.constant dense<0.000000e+00> : vector<16x128xf32>
    %97 = tpu.matmul %89, %96, %cst_48 {dimension_numbers = #tpu.dot_dimension_numbers<[1], [0], [0], [1], [0, 0, 1, 1], [], []>} : vector<16x128xf32>, vector<128x128xf32>, vector<16x128xf32> -> vector<16x128xf32>
    %98 = arith.addf %94, %97 : vector<16x128xf32>
    %c5 = arith.constant 5 : index
    %c0_49 = arith.constant 0 : index
    %c0_50 = arith.constant 0 : index
    %99 = vector.load %arg1[%c5, %c0_49, %c0_50] : memref<6x128x128xf32, #tpu.memory_space<vmem>>, vector<1x128x128xf32>
    %100 = vector.shape_cast %99 : vector<1x128x128xf32> to vector<128x128xf32>
    %cst_51 = arith.constant dense<0.000000e+00> : vector<16x128xf32>
    %101 = tpu.matmul %91, %100, %cst_51 {dimension_numbers = #tpu.dot_dimension_numbers<[1], [0], [0], [1], [0, 0, 1, 1], [], []>} : vector<16x128xf32>, vector<128x128xf32>, vector<16x128xf32> -> vector<16x128xf32>
    %102 = arith.addf %98, %101 : vector<16x128xf32>
    %c3_52 = arith.constant 3 : index
    %c0_53 = arith.constant 0 : index
    %103 = vector.load %arg2[%c3_52, %c0_53] : memref<6x128xf32, #tpu.memory_space<vmem>>, vector<1x128xf32>
    %104 = vector.broadcast %103 : vector<1x128xf32> to vector<16x128xf32>
    %105 = arith.addf %102, %104 : vector<16x128xf32>
    %c4_54 = arith.constant 4 : index
    %c0_55 = arith.constant 0 : index
    %106 = vector.load %arg2[%c4_54, %c0_55] : memref<6x128xf32, #tpu.memory_space<vmem>>, vector<1x128xf32>
    %c5_56 = arith.constant 5 : index
    %c0_57 = arith.constant 0 : index
    %107 = vector.load %arg2[%c5_56, %c0_57] : memref<6x128xf32, #tpu.memory_space<vmem>>, vector<1x128xf32>
    %cst_58 = arith.constant dense<0.000000e+00> : vector<128xf32>
    %108 = vector.multi_reduction <add>, %105, %cst_58 [0] : vector<16x128xf32> to vector<128xf32>
    %109 = vector.shape_cast %108 : vector<128xf32> to vector<1x128xf32>
    %cst_59 = arith.constant dense<0.000000e+00> : vector<1x128xf32>
    %110 = tpu.matmul %109, %52, %cst_59 {dimension_numbers = #tpu.dot_dimension_numbers<[1], [0], [0], [1], [0, 0, 1, 1], [], []>} : vector<1x128xf32>, vector<128x128xf32>, vector<1x128xf32> -> vector<1x128xf32>
    %111 = vector.broadcast %110 : vector<1x128xf32> to vector<16x128xf32>
    %112 = arith.subf %105, %111 : vector<16x128xf32>
    %113 = arith.mulf %112, %112 : vector<16x128xf32>
    %cst_60 = arith.constant dense<0.000000e+00> : vector<128xf32>
    %114 = vector.multi_reduction <add>, %113, %cst_60 [0] : vector<16x128xf32> to vector<128xf32>
    %115 = vector.shape_cast %114 : vector<128xf32> to vector<1x128xf32>
    %cst_61 = arith.constant dense<0.000000e+00> : vector<1x128xf32>
    %116 = tpu.matmul %115, %52, %cst_61 {dimension_numbers = #tpu.dot_dimension_numbers<[1], [0], [0], [1], [0, 0, 1, 1], [], []>} : vector<1x128xf32>, vector<128x128xf32>, vector<1x128xf32> -> vector<1x128xf32>
    %cst_62 = arith.constant 9.99999974E-6 : f32
    %117 = vector.broadcast %cst_62 : f32 to vector<1x128xf32>
    %118 = arith.addf %116, %117 : vector<1x128xf32>
    %119 = math.rsqrt %118 : vector<1x128xf32>
    %120 = arith.mulf %119, %106 : vector<1x128xf32>
    %121 = vector.broadcast %120 : vector<1x128xf32> to vector<16x128xf32>
    %122 = arith.mulf %112, %121 : vector<16x128xf32>
    %123 = vector.broadcast %107 : vector<1x128xf32> to vector<16x128xf32>
    %124 = arith.addf %122, %123 : vector<16x128xf32>
    %125 = arith.addf %124, %0 : vector<16x128xf32>
    %cst_63 = arith.constant 0.000000e+00 : f32
    %126 = vector.broadcast %cst_63 : f32 to vector<16x128xf32>
    %127 = arith.maximumf %125, %126 : vector<16x128xf32>
    %c0_64 = arith.constant 0 : index
    %c0_65 = arith.constant 0 : index
    %128 = vector.load %arg3[%c0_64, %c0_65] : memref<16x128xf32, #tpu.memory_space<vmem>>, vector<16x128xf32>
    tpu.vector_store %arg3[%c0_64, %c0_65], %127 {strides = array<i32>} : memref<16x128xf32, #tpu.memory_space<vmem>>, vector<16x128xf32>,
    return
  }
}

</mosaic_0001>

<llo_original>
// kernel: residual_block.1
$region0: #{residual_block.1}
  #allocation0 [shape = 'u32[]', space=smem, size = 0x4, offset = 0x4, fixed_abs, tag = 'smem constant byte address 0x4 - core index']
  #allocation1 [shape = 'u32[144,128]{1,0:T(1,128)}', space=vmem, size = 0x12000, scoped, tag = 'internal scratch']
  %s0 = inlined_call_operand.vmem [shape: f32[16,128], index: 0, kind: input, shape index: {}]
  %s1 = inlined_call_operand.vmem [shape: f32[6,128,128], index: 1, kind: input, shape index: {}]
  %s2 = inlined_call_operand.vmem [shape: f32[6,128], index: 2, kind: input, shape index: {}]
  %s3 = inlined_call_operand.vmem [shape: f32[16,128], index: 3, kind: output, shape index: {}]
  %s4 = sld [smem:[#allocation0]]
  $region22: #{residual_block.1} parent=0
    _
  %s6 = ssub.s32 1, %s4
  %s7 = scalar_select 0, %s6, %s4
  // Predicated region
  $region2: #{residual_block.1} parent=0 // pred_check
    _
  $region3: #{residual_block.1} parent=0 // pred_check_branch
    %9 = sbr.rel (0) target = $region5
  $region4: #{residual_block.1} parent=0 // pred_region
    _
  $region5: #{residual_block.1} parent=0 // pred_fallthru
    _
  // Predicated region
  $region6: #{residual_block.1} parent=0 // pred_check
    _
  $region7: #{residual_block.1} parent=0 // pred_check_branch
    %11 = sbr.rel (0) target = $region9
  $region8: #{residual_block.1} parent=0 // pred_region
    _
  $region9: #{residual_block.1} parent=0 // pred_fallthru
    _
  // Predicated region
  $region10: #{residual_block.1} parent=0 // pred_check
    _
  $region11: #{residual_block.1} parent=0 // pred_check_branch
    %13 = sbr.rel (0) target = $region13
  $region12: #{residual_block.1} parent=0 // pred_region
    _
  $region13: #{residual_block.1} parent=0 // pred_fallthru
    _
  %v14 = vld [vmem:[%s0] sm:$0xff]
  %v15 = vld [vmem:[%s0 + $0x8] sm:$0xff]
  %v16 = vlaneseq
  %v17 = vshrl.u32 %v16, 7
  %v18 = vadd.s32 %v17, 8
  %v19 = vlaneseq
  %v20 = vand.u32 %v19, 127
  %v21 = vsub.s32 %v17, 1
  %v22 = vsub.s32 %v18, 1
  %vm23 = vcmp.eq.s32.totalorder %v20, %v21
  %vm24 = vcmp.eq.s32.totalorder %v20, %v22
  %v25 = vsel %vm23, 1.0, 0.0
  %v26 = vsel %vm24, 1.0, 0.0
  %v27 = vadd.s32 %v17, 1
  %v28 = vadd.s32 %v18, 1
  %vm29 = vcmp.eq.s32.totalorder %v20, %v27
  %vm30 = vcmp.eq.s32.totalorder %v20, %v28
  %v31 = vsel %vm29, 1.0, 0.0
  %v32 = vsel %vm30, 1.0, 0.0
  %v33 = vadd.s32 %v17, 16
  %v34 = vadd.s32 %v17, 24
  %v35 = vadd.s32 %v17, 32
  %v36 = vadd.s32 %v17, 40
  %v37 = vadd.s32 %v17, 48
  %v38 = vadd.s32 %v17, 56
  %v39 = vadd.s32 %v17, 64
  %v40 = vadd.s32 %v17, 72
  %v41 = vadd.s32 %v17, 80
  %v42 = vadd.s32 %v17, 88
  %v43 = vadd.s32 %v17, 96
  %v44 = vadd.s32 %v17, 104
  %v45 = vadd.s32 %v17, 112
  %v46 = vadd.s32 %v17, 120
  %vm47 = vcmp.lt.s32.totalorder %v17, 0
  %v48 = vsub.s32 0, %v17
  %v49 = vsel %vm47, %v48, %v17
  %v50 = vshrl.u32 %v49, 2
  %v51 = vand.u32 %v49, 3
  %v52 = vsub.s32 0, %v51
  %v53 = vsel %vm47, %v52, %v51
  %vm54 = vcmp.lt.s32.totalorder %v18, 0
  %v55 = vsub.s32 0, %v18
  %v56 = vsel %vm54, %v55, %v18
  %v57 = vshrl.u32 %v56, 2
  %v58 = vand.u32 %v56, 3
  %v59 = vsub.s32 0, %v58
  %v60 = vsel %vm54, %v59, %v58
  %vm61 = vcmp.lt.s32.totalorder %v33, 0
  %v62 = vsub.s32 0, %v33
  %v63 = vsel %vm61, %v62, %v33
  %v64 = vshrl.u32 %v63, 2
  %v65 = vand.u32 %v63, 3
  %v66 = vsub.s32 0, %v65
  %v67 = vsel %vm61, %v66, %v65
  %vm68 = vcmp.lt.s32.totalorder %v34, 0
  %v69 = vsub.s32 0, %v34
  %v70 = vsel %vm68, %v69, %v34
  %v71 = vshrl.u32 %v70, 2
  %v72 = vand.u32 %v70, 3
  %v73 = vsub.s32 0, %v72
  %v74 = vsel %vm68, %v73, %v72
  %vm75 = vcmp.lt.s32.totalorder %v35, 0
  %v76 = vsub.s32 0, %v35
  %v77 = vsel %vm75, %v76, %v35
  %v78 = vshrl.u32 %v77, 2
  %v79 = vand.u32 %v77, 3
  %v80 = vsub.s32 0, %v79
  %v81 = vsel %vm75, %v80, %v79
  %vm82 = vcmp.lt.s32.totalorder %v36, 0
  %v83 = vsub.s32 0, %v36
  %v84 = vsel %vm82, %v83, %v36
  %v85 = vshrl.u32 %v84, 2
  %v86 = vand.u32 %v84, 3
  %v87 = vsub.s32 0, %v86
  %v88 = vsel %vm82, %v87, %v86
  %vm89 = vcmp.lt.s32.totalorder %v37, 0
  %v90 = vsub.s32 0, %v37
  %v91 = vsel %vm89, %v90, %v37
  %v92 = vshrl.u32 %v91, 2
  %v93 = vand.u32 %v91, 3
  %v94 = vsub.s32 0, %v93
  %v95 = vsel %vm89, %v94, %v93
  %vm96 = vcmp.lt.s32.totalorder %v38, 0
  %v97 = vsub.s32 0, %v38
  %v98 = vsel %vm96, %v97, %v38
  %v99 = vshrl.u32 %v98, 2
  %v100 = vand.u32 %v98, 3
  %v101 = vsub.s32 0, %v100
  %v102 = vsel %vm96, %v101, %v100
  %vm103 = vcmp.lt.s32.totalorder %v39, 0
  %v104 = vsub.s32 0, %v39
  %v105 = vsel %vm103, %v104, %v39
  %v106 = vshrl.u32 %v105, 2
  %v107 = vand.u32 %v105, 3
  %v108 = vsub.s32 0, %v107
  %v109 = vsel %vm103, %v108, %v107
  %vm110 = vcmp.lt.s32.totalorder %v40, 0
  %v111 = vsub.s32 0, %v40
  %v112 = vsel %vm110, %v111, %v40
  %v113 = vshrl.u32 %v112, 2
  %v114 = vand.u32 %v112, 3
  %v115 = vsub.s32 0, %v114
  %v116 = vsel %vm110, %v115, %v114
  %vm117 = vcmp.lt.s32.totalorder %v41, 0
  %v118 = vsub.s32 0, %v41
  %v119 = vsel %vm117, %v118, %v41
  %v120 = vshrl.u32 %v119, 2
  %v121 = vand.u32 %v119, 3
  %v122 = vsub.s32 0, %v121
  %v123 = vsel %vm117, %v122, %v121
  %vm124 = vcmp.lt.s32.totalorder %v42, 0
  %v125 = vsub.s32 0, %v42
  %v126 = vsel %vm124, %v125, %v42
  %v127 = vshrl.u32 %v126, 2
  %v128 = vand.u32 %v126, 3
  %v129 = vsub.s32 0, %v128
  %v130 = vsel %vm124, %v129, %v128
  %vm131 = vcmp.lt.s32.totalorder %v43, 0
  %v132 = vsub.s32 0, %v43
  %v133 = vsel %vm131, %v132, %v43
  %v134 = vshrl.u32 %v133, 2
  %v135 = vand.u32 %v133, 3
  %v136 = vsub.s32 0, %v135
  %v137 = vsel %vm131, %v136, %v135
  %vm138 = vcmp.lt.s32.totalorder %v44, 0
  %v139 = vsub.s32 0, %v44
  %v140 = vsel %vm138, %v139, %v44
  %v141 = vshrl.u32 %v140, 2
  %v142 = vand.u32 %v140, 3
  %v143 = vsub.s32 0, %v142
  %v144 = vsel %vm138, %v143, %v142
  %vm145 = vcmp.lt.s32.totalorder %v45, 0
  %v146 = vsub.s32 0, %v45
  %v147 = vsel %vm145, %v146, %v45
  %v148 = vshrl.u32 %v147, 2
  %v149 = vand.u32 %v147, 3
  %v150 = vsub.s32 0, %v149
  %v151 = vsel %vm145, %v150, %v149
  %vm152 = vcmp.lt.s32.totalorder %v46, 0
  %v153 = vsub.s32 0, %v46
  %v154 = vsel %vm152, %v153, %v46
  %v155 = vshrl.u32 %v154, 2
  %v156 = vand.u32 %v154, 3
  %v157 = vsub.s32 0, %v156
  %v158 = vsel %vm152, %v157, %v156
  %vm159 = vcmp.ne.s32.totalorder %v53, 0
  %vm160 = vcmp.ne.s32.totalorder %v60, 0
  %vm161 = vcmp.ne.s32.totalorder %v67, 0
  %vm162 = vcmp.ne.s32.totalorder %v74, 0
  %vm163 = vcmp.ne.s32.totalorder %v81, 0
  %vm164 = vcmp.ne.s32.totalorder %v88, 0
  %vm165 = vcmp.ne.s32.totalorder %v95, 0
  %vm166 = vcmp.ne.s32.totalorder %v102, 0
  %vm167 = vcmp.ne.s32.totalorder %v109, 0
  %vm168 = vcmp.ne.s32.totalorder %v116, 0
  %vm169 = vcmp.ne.s32.totalorder %v123, 0
  %vm170 = vcmp.ne.s32.totalorder %v130, 0
  %vm171 = vcmp.ne.s32.totalorder %v137, 0
  %vm172 = vcmp.ne.s32.totalorder %v144, 0
  %vm173 = vcmp.ne.s32.totalorder %v151, 0
  %vm174 = vcmp.ne.s32.totalorder %v158, 0
  %vm175 = vcmp.lt.s32.totalorder %v53, 0
  %vm176 = vcmp.lt.s32.totalorder %v60, 0
  %vm177 = vcmp.lt.s32.totalorder %v67, 0
  %vm178 = vcmp.lt.s32.totalorder %v74, 0
  %vm179 = vcmp.lt.s32.totalorder %v81, 0
  %vm180 = vcmp.lt.s32.totalorder %v88, 0
  %vm181 = vcmp.lt.s32.totalorder %v95, 0
  %vm182 = vcmp.lt.s32.totalorder %v102, 0
  %vm183 = vcmp.lt.s32.totalorder %v109, 0
  %vm184 = vcmp.lt.s32.totalorder %v116, 0
  %vm185 = vcmp.lt.s32.totalorder %v123, 0
  %vm186 = vcmp.lt.s32.totalorder %v130, 0
  %vm187 = vcmp.lt.s32.totalorder %v137, 0
  %vm188 = vcmp.lt.s32.totalorder %v144, 0
  %vm189 = vcmp.lt.s32.totalorder %v151, 0
  %vm190 = vcmp.lt.s32.totalorder %v158, 0
  %vm191 = vmand %vm175, %vm159
  %vm192 = vmand %vm176, %vm160
  %vm193 = vmand %vm177, %vm161
  %vm194 = vmand %vm178, %vm162
  %vm195 = vmand %vm179, %vm163
  %vm196 = vmand %vm180, %vm164
  %vm197 = vmand %vm181, %vm165
  %vm198 = vmand %vm182, %vm166
  %vm199 = vmand %vm183, %vm167
  %vm200 = vmand %vm184, %vm168
  %vm201 = vmand %vm185, %vm169
  %vm202 = vmand %vm186, %vm170
  %vm203 = vmand %vm187, %vm171
  %vm204 = vmand %vm188, %vm172
  %vm205 = vmand %vm189, %vm173
  %vm206 = vmand %vm190, %vm174
  %v207 = vadd.s32 %v53, 4
  %v208 = vadd.s32 %v60, 4
  %v209 = vadd.s32 %v67, 4
  %v210 = vadd.s32 %v74, 4
  %v211 = vadd.s32 %v81, 4
  %v212 = vadd.s32 %v88, 4
  %v213 = vadd.s32 %v95, 4
  %v214 = vadd.s32 %v102, 4
  %v215 = vadd.s32 %v109, 4
  %v216 = vadd.s32 %v116, 4
  %v217 = vadd.s32 %v123, 4
  %v218 = vadd.s32 %v130, 4
  %v219 = vadd.s32 %v137, 4
  %v220 = vadd.s32 %v144, 4
  %v221 = vadd.s32 %v151, 4
  %v222 = vadd.s32 %v158, 4
  %v223 = vsel %vm191, %v207, %v53
  %v224 = vsel %vm192, %v208, %v60
  %v225 = vsel %vm193, %v209, %v67
  %v226 = vsel %vm194, %v210, %v74
  %v227 = vsel %vm195, %v211, %v81
  %v228 = vsel %vm196, %v212, %v88
  %v229 = vsel %vm197, %v213, %v95
  %v230 = vsel %vm198, %v214, %v102
  %v231 = vsel %vm199, %v215, %v109
  %v232 = vsel %vm200, %v216, %v116
  %v233 = vsel %vm201, %v217, %v123
  %v234 = vsel %vm202, %v218, %v130
  %v235 = vsel %vm203, %v219, %v137
  %v236 = vsel %vm204, %v220, %v144
  %v237 = vsel %vm205, %v221, %v151
  %v238 = vsel %vm206, %v222, %v158
  %vm239 = vcmp.lt.s32.totalorder %v20, 0
  %v240 = vsub.s32 0, %v20
  %v241 = vsel %vm239, %v240, %v20
  %v242 = vshrl.u32 %v241, 2
  %v243 = vand.u32 %v241, 3
  %v244 = vsub.s32 0, %v243
  %v245 = vsel %vm239, %v244, %v243
  %vm246 = vcmp.ne.s32.totalorder %v245, 0
  %vm247 = vcmp.lt.s32.totalorder %v245, 0
  %vm248 = vmand %vm247, %vm246
  %v249 = vadd.s32 %v245, 4
  %v250 = vsel %vm248, %v249, %v245
  %vm251 = vcmp.eq.s32.totalorder %v223, %v250
  %vm252 = vcmp.eq.s32.totalorder %v224, %v250
  %vm253 = vcmp.eq.s32.totalorder %v225, %v250
  %vm254 = vcmp.eq.s32.totalorder %v226, %v250
  %vm255 = vcmp.eq.s32.totalorder %v227, %v250
  %vm256 = vcmp.eq.s32.totalorder %v228, %v250
  %vm257 = vcmp.eq.s32.totalorder %v229, %v250
  %vm258 = vcmp.eq.s32.totalorder %v230, %v250
  %vm259 = vcmp.eq.s32.totalorder %v231, %v250
  %vm260 = vcmp.eq.s32.totalorder %v232, %v250
  %vm261 = vcmp.eq.s32.totalorder %v233, %v250
  %vm262 = vcmp.eq.s32.totalorder %v234, %v250
  %vm263 = vcmp.eq.s32.totalorder %v235, %v250
  %vm264 = vcmp.eq.s32.totalorder %v236, %v250
  %vm265 = vcmp.eq.s32.totalorder %v237, %v250
  %vm266 = vcmp.eq.s32.totalorder %v238, %v250
  %v267 = vsel %vm251, 0.001953125, 0.0
  %v268 = vsel %vm252, 0.001953125, 0.0
  %v269 = vsel %vm253, 0.001953125, 0.0
  %v270 = vsel %vm254, 0.001953125, 0.0
  %v271 = vsel %vm255, 0.001953125, 0.0
  %v272 = vsel %vm256, 0.001953125, 0.0
  %v273 = vsel %vm257, 0.001953125, 0.0
  %v274 = vsel %vm258, 0.001953125, 0.0
  %v275 = vsel %vm259, 0.001953125, 0.0
  %v276 = vsel %vm260, 0.001953125, 0.0
  %v277 = vsel %vm261, 0.001953125, 0.0
  %v278 = vsel %vm262, 0.001953125, 0.0
  %v279 = vsel %vm263, 0.001953125, 0.0
  %v280 = vsel %vm264, 0.001953125, 0.0
  %v281 = vsel %vm265, 0.001953125, 0.0
  %v282 = vsel %vm266, 0.001953125, 0.0
  %vm283 = vcmask 130048
  %v285 = vsel %vm283, %v25, 0
  %v288 = vsel %vm283, %v26, 0
  %290 = vmatprep.subr.mxu0 0.0
  %291 = vmatpush1.msra.mxu0 0.0
  %292 = vmatprep.subr.mxu0 0.0
  %293 = vmatpush1.msra.mxu0 0.0
  %294 = vmatprep.subr.mxu0 0.0
  %295 = vmatpush1.msra.mxu0 0.0
  %296 = vmatprep.subr.mxu0 0.0
  %297 = vmatpush1.msra.mxu0 0.0
  %298 = vmatprep.subr.mxu0 0.0
  %299 = vmatpush1.msra.mxu0 0.0
  %300 = vmatprep.subr.mxu0 0.0
  %301 = vmatpush1.msra.mxu0 0.0
  %302 = vmatprep.subr.mxu0 0.0
  %303 = vmatpush1.msra.mxu0 0.0
  %304 = vmatprep.subr.mxu0 0.0
  %305 = vmatpush1.msra.mxu0 0.0
  %306 = vmatprep.subr.mxu0 0.0
  %307 = vmatpush1.msra.mxu0 0.0
  %308 = vmatprep.subr.mxu0 0.0
  %309 = vmatpush1.msra.mxu0 0.0
  %310 = vmatprep.subr.mxu0 0.0
  %311 = vmatpush1.msra.mxu0 0.0
  %312 = vmatprep.subr.mxu0 0.0
  %313 = vmatpush1.msra.mxu0 0.0
  %314 = vmatprep.subr.mxu0 0.0
  %315 = vmatpush1.msra.mxu0 0.0
  %316 = vmatprep.subr.mxu0 0.0
  %317 = vmatpush1.msra.mxu0 0.0
  %318 = vmatprep.subr.mxu0 0.0
  %319 = vmatpush1.msra.mxu0 %v15
  %320 = vmatprep.subr.mxu0 0.0
  %321 = vmatpush1.msra.mxu0 %v14
  %322 = vmatprep.subr.mxu0 0.0
  %323 = vmatpush2.msra.mxu0 0.0
  %324 = vmatprep.subr.mxu0 0.0
  %325 = vmatpush2.msra.mxu0 0.0
  %326 = vmatprep.subr.mxu0 0.0
  %327 = vmatpush2.msra.mxu0 0.0
  %328 = vmatprep.subr.mxu0 0.0
  %329 = vmatpush2.msra.mxu0 0.0
  %330 = vmatprep.subr.mxu0 0.0
  %331 = vmatpush2.msra.mxu0 0.0
  %332 = vmatprep.subr.mxu0 0.0
  %333 = vmatpush2.msra.mxu0 0.0
  %334 = vmatprep.subr.mxu0 0.0
  %335 = vmatpush2.msra.mxu0 0.0
  %336 = vmatprep.subr.mxu0 0.0
  %337 = vmatpush2.msra.mxu0 0.0
  %338 = vmatprep.subr.mxu0 0.0
  %339 = vmatpush2.msra.mxu0 0.0
  %340 = vmatprep.subr.mxu0 0.0
  %341 = vmatpush2.msra.mxu0 0.0
  %342 = vmatprep.subr.mxu0 0.0
  %343 = vmatpush2.msra.mxu0 0.0
  %344 = vmatprep.subr.mxu0 0.0
  %345 = vmatpush2.msra.mxu0 0.0
  %346 = vmatprep.subr.mxu0 0.0
  %347 = vmatpush2.msra.mxu0 0.0
  %348 = vmatprep.subr.mxu0 0.0
  %349 = vmatpush2.msra.mxu0 0.0
  %350 = vmatprep.subr.mxu0 0.0
  %351 = vmatpush2.msra.mxu0 0.0
  %352 = vmatprep.subr.mxu0 0.0
  %353 = vmatpush2.msra.mxu0 0.0
  %354 = vmatprep.mubr.f32.mxu0 0.0
  %355 = vmatmul.mubr.f32.gmra.mxu0 %v285
  %v356 = vpop.f32.mrf.mxu0
  %v357 = vadd.f32 0.0, %v356
  %v358 = vpop.f32.mrf.mxu0
  %359 = vmatprep.mubr.f32.mxu0 0.0
  %360 = vmatmul.mubr.f32.gmra.mxu0 %v288
  %v361 = vpop.f32.mrf.mxu0
  %v362 = vadd.f32 0.0, %v361
  %v363 = vpop.f32.mrf.mxu0
  %364 = vdwg.mxu0
  %v366 = vsel %vm283, %v31, 0
  %v369 = vsel %vm283, %v32, 0
  %371 = vmatprep.subr.mxu0 0.0
  %372 = vmatpush1.msra.mxu0 0.0
  %373 = vmatprep.subr.mxu0 0.0
  %374 = vmatpush1.msra.mxu0 0.0
  %375 = vmatprep.subr.mxu0 0.0
  %376 = vmatpush1.msra.mxu0 0.0
  %377 = vmatprep.subr.mxu0 0.0
  %378 = vmatpush1.msra.mxu0 0.0
  %379 = vmatprep.subr.mxu0 0.0
  %380 = vmatpush1.msra.mxu0 0.0
  %381 = vmatprep.subr.mxu0 0.0
  %382 = vmatpush1.msra.mxu0 0.0
  %383 = vmatprep.subr.mxu0 0.0
  %384 = vmatpush1.msra.mxu0 0.0
  %385 = vmatprep.subr.mxu0 0.0
  %386 = vmatpush1.msra.mxu0 0.0
  %387 = vmatprep.subr.mxu0 0.0
  %388 = vmatpush1.msra.mxu0 0.0
  %389 = vmatprep.subr.mxu0 0.0
  %390 = vmatpush1.msra.mxu0 0.0
  %391 = vmatprep.subr.mxu0 0.0
  %392 = vmatpush1.msra.mxu0 0.0
  %393 = vmatprep.subr.mxu0 0.0
  %394 = vmatpush1.msra.mxu0 0.0
  %395 = vmatprep.subr.mxu0 0.0
  %396 = vmatpush1.msra.mxu0 0.0
  %397 = vmatprep.subr.mxu0 0.0
  %398 = vmatpush1.msra.mxu0 0.0
  %399 = vmatprep.subr.mxu0 0.0
  %400 = vmatpush1.msra.mxu0 %v15
  %401 = vmatprep.subr.mxu0 0.0
  %402 = vmatpush1.msra.mxu0 %v14
  %403 = vmatprep.subr.mxu0 0.0
  %404 = vmatpush2.msra.mxu0 0.0
  %405 = vmatprep.subr.mxu0 0.0
  %406 = vmatpush2.msra.mxu0 0.0
  %407 = vmatprep.subr.mxu0 0.0
  %408 = vmatpush2.msra.mxu0 0.0
  %409 = vmatprep.subr.mxu0 0.0
  %410 = vmatpush2.msra.mxu0 0.0
  %411 = vmatprep.subr.mxu0 0.0
  %412 = vmatpush2.msra.mxu0 0.0
  %413 = vmatprep.subr.mxu0 0.0
  %414 = vmatpush2.msra.mxu0 0.0
  %415 = vmatprep.subr.mxu0 0.0
  %416 = vmatpush2.msra.mxu0 0.0
  %417 = vmatprep.subr.mxu0 0.0
  %418 = vmatpush2.msra.mxu0 0.0
  %419 = vmatprep.subr.mxu0 0.0
  %420 = vmatpush2.msra.mxu0 0.0
  %421 = vmatprep.subr.mxu0 0.0
  %422 = vmatpush2.msra.mxu0 0.0
  %423 = vmatprep.subr.mxu0 0.0
  %424 = vmatpush2.msra.mxu0 0.0
  %425 = vmatprep.subr.mxu0 0.0
  %426 = vmatpush2.msra.mxu0 0.0
  %427 = vmatprep.subr.mxu0 0.0
  %428 = vmatpush2.msra.mxu0 0.0
  %429 = vmatprep.subr.mxu0 0.0
  %430 = vmatpush2.msra.mxu0 0.0
  %431 = vmatprep.subr.mxu0 0.0
  %432 = vmatpush2.msra.mxu0 0.0
  %433 = vmatprep.subr.mxu0 0.0
  %434 = vmatpush2.msra.mxu0 0.0
  %435 = vmatprep.mubr.f32.mxu0 0.0
  %436 = vmatmul.mubr.f32.gmra.mxu0 %v366
  %v437 = vpop.f32.mrf.mxu0
  %v438 = vadd.f32 0.0, %v437
  %v439 = vpop.f32.mrf.mxu0
  %440 = vmatprep.mubr.f32.mxu0 0.0
  %441 = vmatmul.mubr.f32.gmra.mxu0 %v369
  %v442 = vpop.f32.mrf.mxu0
  %v443 = vadd.f32 0.0, %v442
  %v444 = vpop.f32.mrf.mxu0
  %445 = vdwg.mxu0
  %v446 = vld [vmem:[%s1] sm:$0xff]
  %v447 = vld [vmem:[%s1 + $0x8] sm:$0xff]
  %v448 = vld [vmem:[%s1 + $0x10] sm:$0xff]
  %v449 = vld [vmem:[%s1 + $0x18] sm:$0xff]
  %v450 = vld [vmem:[%s1 + $0x20] sm:$0xff]
  %v451 = vld [vmem:[%s1 + $0x28] sm:$0xff]
  %v452 = vld [vmem:[%s1 + $0x30] sm:$0xff]
  %v453 = vld [vmem:[%s1 + $0x38] sm:$0xff]
  %v454 = vld [vmem:[%s1 + $0x40] sm:$0xff]
  %v455 = vld [vmem:[%s1 + $0x48] sm:$0xff]
  %v456 = vld [vmem:[%s1 + $0x50] sm:$0xff]
  %v457 = vld [vmem:[%s1 + $0x58] sm:$0xff]
  %v458 = vld [vmem:[%s1 + $0x60] sm:$0xff]
  %v459 = vld [vmem:[%s1 + $0x68] sm:$0xff]
  %v460 = vld [vmem:[%s1 + $0x70] sm:$0xff]
  %v461 = vld [vmem:[%s1 + $0x78] sm:$0xff]
  %s462 = scalar_lea.vmem %s1, 128
  %v463 = vld [vmem:[%s462] sm:$0xff]
  %v464 = vld [vmem:[%s462 + $0x8] sm:$0xff]
  %v465 = vld [vmem:[%s462 + $0x10] sm:$0xff]
  %v466 = vld [vmem:[%s462 + $0x18] sm:$0xff]
  %v467 = vld [vmem:[%s462 + $0x20] sm:$0xff]
  %v468 = vld [vmem:[%s462 + $0x28] sm:$0xff]
  %v469 = vld [vmem:[%s462 + $0x30] sm:$0xff]
  %v470 = vld [vmem:[%s462 + $0x38] sm:$0xff]
  %v471 = vld [vmem:[%s462 + $0x40] sm:$0xff]
  %v472 = vld [vmem:[%s462 + $0x48] sm:$0xff]
  %v473 = vld [vmem:[%s462 + $0x50] sm:$0xff]
  %v474 = vld [vmem:[%s462 + $0x58] sm:$0xff]
  %v475 = vld [vmem:[%s462 + $0x60] sm:$0xff]
  %v476 = vld [vmem:[%s462 + $0x68] sm:$0xff]
  %v477 = vld [vmem:[%s462 + $0x70] sm:$0xff]
  %v478 = vld [vmem:[%s462 + $0x78] sm:$0xff]
  %479 = vmatprep.subr.mxu0 0.0
  %480 = vmatpush1.msra.mxu0 %v478
  %481 = vmatprep.subr.mxu0 0.0
  %482 = vmatpush1.msra.mxu0 %v477
  %483 = vmatprep.subr.mxu0 0.0
  %484 = vmatpush1.msra.mxu0 %v476
  %485 = vmatprep.subr.mxu0 0.0
  %486 = vmatpush1.msra.mxu0 %v475
  %487 = vmatprep.subr.mxu0 0.0
  %488 = vmatpush1.msra.mxu0 %v474
  %489 = vmatprep.subr.mxu0 0.0
  %490 = vmatpush1.msra.mxu0 %v473
  %491 = vmatprep.subr.mxu0 0.0
  %492 = vmatpush1.msra.mxu0 %v472
  %493 = vmatprep.subr.mxu0 0.0
  %494 = vmatpush1.msra.mxu0 %v471
  %495 = vmatprep.subr.mxu0 0.0
  %496 = vmatpush1.msra.mxu0 %v470
  %497 = vmatprep.subr.mxu0 0.0
  %498 = vmatpush1.msra.mxu0 %v469
  %499 = vmatprep.subr.mxu0 0.0
  %500 = vmatpush1.msra.mxu0 %v468
  %501 = vmatprep.subr.mxu0 0.0
  %502 = vmatpush1.msra.mxu0 %v467
  %503 = vmatprep.subr.mxu0 0.0
  %504 = vmatpush1.msra.mxu0 %v466
  %505 = vmatprep.subr.mxu0 0.0
  %506 = vmatpush1.msra.mxu0 %v465
  %507 = vmatprep.subr.mxu0 0.0
  %508 = vmatpush1.msra.mxu0 %v464
  %509 = vmatprep.subr.mxu0 0.0
  %510 = vmatpush1.msra.mxu0 %v463
  %511 = vmatprep.subr.mxu0 0.0
  %512 = vmatpush2.msra.mxu0 0.0
  %513 = vmatprep.subr.mxu0 0.0
  %514 = vmatpush2.msra.mxu0 0.0
  %515 = vmatprep.subr.mxu0 0.0
  %516 = vmatpush2.msra.mxu0 0.0
  %517 = vmatprep.subr.mxu0 0.0
  %518 = vmatpush2.msra.mxu0 0.0
  %519 = vmatprep.subr.mxu0 0.0
  %520 = vmatpush2.msra.mxu0 0.0
  %521 = vmatprep.subr.mxu0 0.0
  %522 = vmatpush2.msra.mxu0 0.0
  %523 = vmatprep.subr.mxu0 0.0
  %524 = vmatpush2.msra.mxu0 0.0
  %525 = vmatprep.subr.mxu0 0.0
  %526 = vmatpush2.msra.mxu0 0.0
  %527 = vmatprep.subr.mxu0 0.0
  %528 = vmatpush2.msra.mxu0 0.0
  %529 = vmatprep.subr.mxu0 0.0
  %530 = vmatpush2.msra.mxu0 0.0
  %531 = vmatprep.subr.mxu0 0.0
  %532 = vmatpush2.msra.mxu0 0.0
  %533 = vmatprep.subr.mxu0 0.0
  %534 = vmatpush2.msra.mxu0 0.0
  %535 = vmatprep.subr.mxu0 0.0
  %536 = vmatpush2.msra.mxu0 0.0
  %537 = vmatprep.subr.mxu0 0.0
  %538 = vmatpush2.msra.mxu0 0.0
  %539 = vmatprep.subr.mxu0 0.0
  %540 = vmatpush2.msra.mxu0 0.0
  %541 = vmatprep.subr.mxu0 0.0
  %542 = vmatpush2.msra.mxu0 0.0
  %543 = vmatprep.mubr.f32.mxu0 0.0
  %544 = vmatmul.mubr.f32.gmra.mxu0 %v14
  %v545 = vpop.f32.mrf.mxu0
  %v546 = vadd.f32 0.0, %v545
  %v547 = vpop.f32.mrf.mxu0
  %548 = vmatprep.mubr.f32.mxu0 0.0
  %549 = vmatmul.mubr.f32.gmra.mxu0 %v15
  %v550 = vpop.f32.mrf.mxu0
  %v551 = vadd.f32 0.0, %v550
  %v552 = vpop.f32.mrf.mxu0
  %553 = vdwg.mxu0
  %554 = vmatprep.subr.mxu0 0.0
  %555 = vmatpush1.msra.mxu0 %v461
  %556 = vmatprep.subr.mxu0 0.0
  %557 = vmatpush1.msra.mxu0 %v460
  %558 = vmatprep.subr.mxu0 0.0
  %559 = vmatpush1.msra.mxu0 %v459
  %560 = vmatprep.subr.mxu0 0.0
  %561 = vmatpush1.msra.mxu0 %v458
  %562 = vmatprep.subr.mxu0 0.0
  %563 = vmatpush1.msra.mxu0 %v457
  %564 = vmatprep.subr.mxu0 0.0
  %565 = vmatpush1.msra.mxu0 %v456
  %566 = vmatprep.subr.mxu0 0.0
  %567 = vmatpush1.msra.mxu0 %v455
  %568 = vmatprep.subr.mxu0 0.0
  %569 = vmatpush1.msra.mxu0 %v454
  %570 = vmatprep.subr.mxu0 0.0
  %571 = vmatpush1.msra.mxu0 %v453
  %572 = vmatprep.subr.mxu0 0.0
  %573 = vmatpush1.msra.mxu0 %v452
  %574 = vmatprep.subr.mxu0 0.0
  %575 = vmatpush1.msra.mxu0 %v451
  %576 = vmatprep.subr.mxu0 0.0
  %577 = vmatpush1.msra.mxu0 %v450
  %578 = vmatprep.subr.mxu0 0.0
  %579 = vmatpush1.msra.mxu0 %v449
  %580 = vmatprep.subr.mxu0 0.0
  %581 = vmatpush1.msra.mxu0 %v448
  %582 = vmatprep.subr.mxu0 0.0
  %583 = vmatpush1.msra.mxu0 %v447
  %584 = vmatprep.subr.mxu0 0.0
  %585 = vmatpush1.msra.mxu0 %v446
  %586 = vmatprep.subr.mxu0 0.0
  %587 = vmatpush2.msra.mxu0 0.0
  %588 = vmatprep.subr.mxu0 0.0
  %589 = vmatpush2.msra.mxu0 0.0
  %590 = vmatprep.subr.mxu0 0.0
  %591 = vmatpush2.msra.mxu0 0.0
  %592 = vmatprep.subr.mxu0 0.0
  %593 = vmatpush2.msra.mxu0 0.0
  %594 = vmatprep.subr.mxu0 0.0
  %595 = vmatpush2.msra.mxu0 0.0
  %596 = vmatprep.subr.mxu0 0.0
  %597 = vmatpush2.msra.mxu0 0.0
  %598 = vmatprep.subr.mxu0 0.0
  %599 = vmatpush2.msra.mxu0 0.0
  %600 = vmatprep.subr.mxu0 0.0
  %601 = vmatpush2.msra.mxu0 0.0
  %602 = vmatprep.subr.mxu0 0.0
  %603 = vmatpush2.msra.mxu0 0.0
  %604 = vmatprep.subr.mxu0 0.0
  %605 = vmatpush2.msra.mxu0 0.0
  %606 = vmatprep.subr.mxu0 0.0
  %607 = vmatpush2.msra.mxu0 0.0
  %608 = vmatprep.subr.mxu0 0.0
  %609 = vmatpush2.msra.mxu0 0.0
  %610 = vmatprep.subr.mxu0 0.0
  %611 = vmatpush2.msra.mxu0 0.0
  %612 = vmatprep.subr.mxu0 0.0
  %613 = vmatpush2.msra.mxu0 0.0
  %614 = vmatprep.subr.mxu0 0.0
  %615 = vmatpush2.msra.mxu0 0.0
  %616 = vmatprep.subr.mxu0 0.0
  %617 = vmatpush2.msra.mxu0 0.0
  %618 = vmatprep.mubr.f32.mxu0 0.0
  %619 = vmatmul.mubr.f32.gmra.mxu0 %v357
  %v620 = vpop.f32.mrf.mxu0
  %v621 = vadd.f32 %v546, %v620
  %v622 = vpop.f32.mrf.mxu0
  %623 = vmatprep.mubr.f32.mxu0 0.0
  %624 = vmatmul.mubr.f32.gmra.mxu0 %v362
  %v625 = vpop.f32.mrf.mxu0
  %v626 = vadd.f32 %v551, %v625
  %v627 = vpop.f32.mrf.mxu0
  %628 = vdwg.mxu0
  %s629 = scalar_lea.vmem %s1, 256
  %v630 = vld [vmem:[%s629] sm:$0xff]
  %v631 = vld [vmem:[%s629 + $0x8] sm:$0xff]
  %v632 = vld [vmem:[%s629 + $0x10] sm:$0xff]
  %v633 = vld [vmem:[%s629 + $0x18] sm:$0xff]
  %v634 = vld [vmem:[%s629 + $0x20] sm:$0xff]
  %v635 = vld [vmem:[%s629 + $0x28] sm:$0xff]
  %v636 = vld [vmem:[%s629 + $0x30] sm:$0xff]
  %v637 = vld [vmem:[%s629 + $0x38] sm:$0xff]
  %v638 = vld [vmem:[%s629 + $0x40] sm:$0xff]
  %v639 = vld [vmem:[%s629 + $0x48] sm:$0xff]
  %v640 = vld [vmem:[%s629 + $0x50] sm:$0xff]
  %v641 = vld [vmem:[%s629 + $0x58] sm:$0xff]
  %v642 = vld [vmem:[%s629 + $0x60] sm:$0xff]
  %v643 = vld [vmem:[%s629 + $0x68] sm:$0xff]
  %v644 = vld [vmem:[%s629 + $0x70] sm:$0xff]
  %v645 = vld [vmem:[%s629 + $0x78] sm:$0xff]
  %646 = vmatprep.subr.mxu0 0.0
  %647 = vmatpush1.msra.mxu0 %v645
  %648 = vmatprep.subr.mxu0 0.0
  %649 = vmatpush1.msra.mxu0 %v644
  %650 = vmatprep.subr.mxu0 0.0
  %651 = vmatpush1.msra.mxu0 %v643
  %652 = vmatprep.subr.mxu0 0.0
  %653 = vmatpush1.msra.mxu0 %v642
  %654 = vmatprep.subr.mxu0 0.0
  %655 = vmatpush1.msra.mxu0 %v641
  %656 = vmatprep.subr.mxu0 0.0
  %657 = vmatpush1.msra.mxu0 %v640
  %658 = vmatprep.subr.mxu0 0.0
  %659 = vmatpush1.msra.mxu0 %v639
  %660 = vmatprep.subr.mxu0 0.0
  %661 = vmatpush1.msra.mxu0 %v638
  %662 = vmatprep.subr.mxu0 0.0
  %663 = vmatpush1.msra.mxu0 %v637
  %664 = vmatprep.subr.mxu0 0.0
  %665 = vmatpush1.msra.mxu0 %v636
  %666 = vmatprep.subr.mxu0 0.0
  %667 = vmatpush1.msra.mxu0 %v635
  %668 = vmatprep.subr.mxu0 0.0
  %669 = vmatpush1.msra.mxu0 %v634
  %670 = vmatprep.subr.mxu0 0.0
  %671 = vmatpush1.msra.mxu0 %v633
  %672 = vmatprep.subr.mxu0 0.0
  %673 = vmatpush1.msra.mxu0 %v632
  %674 = vmatprep.subr.mxu0 0.0
  %675 = vmatpush1.msra.mxu0 %v631
  %676 = vmatprep.subr.mxu0 0.0
  %677 = vmatpush1.msra.mxu0 %v630
  %678 = vmatprep.subr.mxu0 0.0
  %679 = vmatpush2.msra.mxu0 0.0
  %680 = vmatprep.subr.mxu0 0.0
  %681 = vmatpush2.msra.mxu0 0.0
  %682 = vmatprep.subr.mxu0 0.0
  %683 = vmatpush2.msra.mxu0 0.0
  %684 = vmatprep.subr.mxu0 0.0
  %685 = vmatpush2.msra.mxu0 0.0
  %686 = vmatprep.subr.mxu0 0.0
  %687 = vmatpush2.msra.mxu0 0.0
  %688 = vmatprep.subr.mxu0 0.0
  %689 = vmatpush2.msra.mxu0 0.0
  %690 = vmatprep.subr.mxu0 0.0
  %691 = vmatpush2.msra.mxu0 0.0
  %692 = vmatprep.subr.mxu0 0.0
  %693 = vmatpush2.msra.mxu0 0.0
  %694 = vmatprep.subr.mxu0 0.0
  %695 = vmatpush2.msra.mxu0 0.0
  %696 = vmatprep.subr.mxu0 0.0
  %697 = vmatpush2.msra.mxu0 0.0
  %698 = vmatprep.subr.mxu0 0.0
  %699 = vmatpush2.msra.mxu0 0.0
  %700 = vmatprep.subr.mxu0 0.0
  %701 = vmatpush2.msra.mxu0 0.0
  %702 = vmatprep.subr.mxu0 0.0
  %703 = vmatpush2.msra.mxu0 0.0
  %704 = vmatprep.subr.mxu0 0.0
  %705 = vmatpush2.msra.mxu0 0.0
  %706 = vmatprep.subr.mxu0 0.0
  %707 = vmatpush2.msra.mxu0 0.0
  %708 = vmatprep.subr.mxu0 0.0
  %709 = vmatpush2.msra.mxu0 0.0
  %710 = vmatprep.mubr.f32.mxu0 0.0
  %711 = vmatmul.mubr.f32.gmra.mxu0 %v438
  %v712 = vpop.f32.mrf.mxu0
  %v713 = vadd.f32 0.0, %v712
  %v714 = vpop.f32.mrf.mxu0
  %715 = vmatprep.mubr.f32.mxu0 0.0
  %716 = vmatmul.mubr.f32.gmra.mxu0 %v443
  %v717 = vpop.f32.mrf.mxu0
  %v718 = vadd.f32 0.0, %v717
  %v719 = vpop.f32.mrf.mxu0
  %720 = vdwg.mxu0
  %v721 = vadd.f32 %v621, %v713
  %v722 = vadd.f32 %v626, %v718
  %v723 = vld [vmem:[%s2] sm:$0x1]
  %v724 = vlaneseq
  %v725 = vshrl.u32 %v724, 7
  %v726 = vsub.s32 0, %v725
  %v727 = vrot.slane %v723, %v726
  %v728 = vadd.f32 %v721, %v727
  %v729 = vadd.f32 %v722, %v727
  %v730 = vld [vmem:[%s2 + $0x1] sm:$0x1]
  %v731 = vld [vmem:[%s2 + $0x2] sm:$0x1]
  %v732 = vadd.f32 %v728, %v729
  %v733 = vrot.slane %v732, 4
  %v734 = vadd.f32 %v732, %v733
  %v735 = vrot.slane %v734, 2
  %v736 = vadd.f32 %v734, %v735
  %v737 = vrot.slane %v736, 1
  %v738 = vadd.f32 %v736, %v737
  %739 = vmatprep.subr.mxu0 0.0
  %740 = vmatpush1.msra.mxu0 %v282
  %741 = vmatprep.subr.mxu0 0.0
  %742 = vmatpush1.msra.mxu0 %v281
  %743 = vmatprep.subr.mxu0 0.0
  %744 = vmatpush1.msra.mxu0 %v280
  %745 = vmatprep.subr.mxu0 0.0
  %746 = vmatpush1.msra.mxu0 %v279
  %747 = vmatprep.subr.mxu0 0.0
  %748 = vmatpush1.msra.mxu0 %v278
  %749 = vmatprep.subr.mxu0 0.0
  %750 = vmatpush1.msra.mxu0 %v277
  %751 = vmatprep.subr.mxu0 0.0
  %752 = vmatpush1.msra.mxu0 %v276
  %753 = vmatprep.subr.mxu0 0.0
  %754 = vmatpush1.msra.mxu0 %v275
  %755 = vmatprep.subr.mxu0 0.0
  %756 = vmatpush1.msra.mxu0 %v274
  %757 = vmatprep.subr.mxu0 0.0
  %758 = vmatpush1.msra.mxu0 %v273
  %759 = vmatprep.subr.mxu0 0.0
  %760 = vmatpush1.msra.mxu0 %v272
  %761 = vmatprep.subr.mxu0 0.0
  %762 = vmatpush1.msra.mxu0 %v271
  %763 = vmatprep.subr.mxu0 0.0
  %764 = vmatpush1.msra.mxu0 %v270
  %765 = vmatprep.subr.mxu0 0.0
  %766 = vmatpush1.msra.mxu0 %v269
  %767 = vmatprep.subr.mxu0 0.0
  %768 = vmatpush1.msra.mxu0 %v268
  %769 = vmatprep.subr.mxu0 0.0
  %770 = vmatpush1.msra.mxu0 %v267
  %771 = vmatprep.subr.mxu0 0.0
  %772 = vmatpush2.msra.mxu0 0.0
  %773 = vmatprep.subr.mxu0 0.0
  %774 = vmatpush2.msra.mxu0 0.0
  %775 = vmatprep.subr.mxu0 0.0
  %776 = vmatpush2.msra.mxu0 0.0
  %777 = vmatprep.subr.mxu0 0.0
  %778 = vmatpush2.msra.mxu0 0.0
  %779 = vmatprep.subr.mxu0 0.0
  %780 = vmatpush2.msra.mxu0 0.0
  %781 = vmatprep.subr.mxu0 0.0
  %782 = vmatpush2.msra.mxu0 0.0
  %783 = vmatprep.subr.mxu0 0.0
  %784 = vmatpush2.msra.mxu0 0.0
  %785 = vmatprep.subr.mxu0 0.0
  %786 = vmatpush2.msra.mxu0 0.0
  %787 = vmatprep.subr.mxu0 0.0
  %788 = vmatpush2.msra.mxu0 0.0
  %789 = vmatprep.subr.mxu0 0.0
  %790 = vmatpush2.msra.mxu0 0.0
  %791 = vmatprep.subr.mxu0 0.0
  %792 = vmatpush2.msra.mxu0 0.0
  %793 = vmatprep.subr.mxu0 0.0
  %794 = vmatpush2.msra.mxu0 0.0
  %795 = vmatprep.subr.mxu0 0.0
  %796 = vmatpush2.msra.mxu0 0.0
  %797 = vmatprep.subr.mxu0 0.0
  %798 = vmatpush2.msra.mxu0 0.0
  %799 = vmatprep.subr.mxu0 0.0
  %800 = vmatpush2.msra.mxu0 0.0
  %801 = vmatprep.subr.mxu0 0.0
  %802 = vmatpush2.msra.mxu0 0.0
  %803 = vmatprep.mubr.f32.mxu0 0.0
  %804 = vmatmul.mubr.f32.gmra.mxu0 %v738
  %v805 = vpop.f32.mrf.mxu0
  %v806 = vadd.f32 0.0, %v805
  %v807 = vpop.f32.mrf.mxu0
  %808 = vdwg.mxu0
  %v809 = vlaneseq
  %v810 = vshrl.u32 %v809, 7
  %v811 = vsub.s32 0, %v810
  %v812 = vrot.slane %v806, %v811
  %v813 = vsub.f32 %v728, %v812
  %v814 = vsub.f32 %v729, %v812
  %v815 = vmul.f32 %v813, %v813
  %v816 = vmul.f32 %v814, %v814
  %v817 = vadd.f32 %v815, %v816
  %v818 = vrot.slane %v817, 4
  %v819 = vadd.f32 %v817, %v818
  %v820 = vrot.slane %v819, 2
  %v821 = vadd.f32 %v819, %v820
  %v822 = vrot.slane %v821, 1
  %v823 = vadd.f32 %v821, %v822
  %824 = vmatprep.subr.mxu0 0.0
  %825 = vmatpush1.msra.mxu0 %v282
  %826 = vmatprep.subr.mxu0 0.0
  %827 = vmatpush1.msra.mxu0 %v281
  %828 = vmatprep.subr.mxu0 0.0
  %829 = vmatpush1.msra.mxu0 %v280
  %830 = vmatprep.subr.mxu0 0.0
  %831 = vmatpush1.msra.mxu0 %v279
  %832 = vmatprep.subr.mxu0 0.0
  %833 = vmatpush1.msra.mxu0 %v278
  %834 = vmatprep.subr.mxu0 0.0
  %835 = vmatpush1.msra.mxu0 %v277
  %836 = vmatprep.subr.mxu0 0.0
  %837 = vmatpush1.msra.mxu0 %v276
  %838 = vmatprep.subr.mxu0 0.0
  %839 = vmatpush1.msra.mxu0 %v275
  %840 = vmatprep.subr.mxu0 0.0
  %841 = vmatpush1.msra.mxu0 %v274
  %842 = vmatprep.subr.mxu0 0.0
  %843 = vmatpush1.msra.mxu0 %v273
  %844 = vmatprep.subr.mxu0 0.0
  %845 = vmatpush1.msra.mxu0 %v272
  %846 = vmatprep.subr.mxu0 0.0
  %847 = vmatpush1.msra.mxu0 %v271
  %848 = vmatprep.subr.mxu0 0.0
  %849 = vmatpush1.msra.mxu0 %v270
  %850 = vmatprep.subr.mxu0 0.0
  %851 = vmatpush1.msra.mxu0 %v269
  %852 = vmatprep.subr.mxu0 0.0
  %853 = vmatpush1.msra.mxu0 %v268
  %854 = vmatprep.subr.mxu0 0.0
  %855 = vmatpush1.msra.mxu0 %v267
  %856 = vmatprep.subr.mxu0 0.0
  %857 = vmatpush2.msra.mxu0 0.0
  %858 = vmatprep.subr.mxu0 0.0
  %859 = vmatpush2.msra.mxu0 0.0
  %860 = vmatprep.subr.mxu0 0.0
  %861 = vmatpush2.msra.mxu0 0.0
  %862 = vmatprep.subr.mxu0 0.0
  %863 = vmatpush2.msra.mxu0 0.0
  %864 = vmatprep.subr.mxu0 0.0
  %865 = vmatpush2.msra.mxu0 0.0
  %866 = vmatprep.subr.mxu0 0.0
  %867 = vmatpush2.msra.mxu0 0.0
  %868 = vmatprep.subr.mxu0 0.0
  %869 = vmatpush2.msra.mxu0 0.0
  %870 = vmatprep.subr.mxu0 0.0
  %871 = vmatpush2.msra.mxu0 0.0
  %872 = vmatprep.subr.mxu0 0.0
  %873 = vmatpush2.msra.mxu0 0.0
  %874 = vmatprep.subr.mxu0 0.0
  %875 = vmatpush2.msra.mxu0 0.0
  %876 = vmatprep.subr.mxu0 0.0
  %877 = vmatpush2.msra.mxu0 0.0
  %878 = vmatprep.subr.mxu0 0.0
  %879 = vmatpush2.msra.mxu0 0.0
  %880 = vmatprep.subr.mxu0 0.0
  %881 = vmatpush2.msra.mxu0 0.0
  %882 = vmatprep.subr.mxu0 0.0
  %883 = vmatpush2.msra.mxu0 0.0
  %884 = vmatprep.subr.mxu0 0.0
  %885 = vmatpush2.msra.mxu0 0.0
  %886 = vmatprep.subr.mxu0 0.0
  %887 = vmatpush2.msra.mxu0 0.0
  %888 = vmatprep.mubr.f32.mxu0 0.0
  %889 = vmatmul.mubr.f32.gmra.mxu0 %v823
  %v890 = vpop.f32.mrf.mxu0
  %v891 = vadd.f32 1e-05, %v890
  %v892 = vpop.f32.mrf.mxu0
  %893 = vdwg.mxu0
  %v894 = vrsqrt.pop %v891
  %v895 = vmul.f32 %v894, %v730
  %v896 = vlaneseq
  %v897 = vshrl.u32 %v896, 7
  %v898 = vsub.s32 0, %v897
  %v899 = vrot.slane %v895, %v898
  %v900 = vmul.f32 %v813, %v899
  %v901 = vmul.f32 %v814, %v899
  %v902 = vlaneseq
  %v903 = vshrl.u32 %v902, 7
  %v904 = vsub.s32 0, %v903
  %v905 = vrot.slane %v731, %v904
  %v906 = vadd.f32 %v900, %v905
  %v907 = vadd.f32 %v901, %v905
  %v908 = vmax.f32 %v906, 0.0
  %v909 = vmax.f32 %v907, 0.0
  %910 = vmatprep.subr.mxu0 0.0
  %911 = vmatpush1.msra.mxu0 0.0
  %912 = vmatprep.subr.mxu0 0.0
  %913 = vmatpush1.msra.mxu0 0.0
  %914 = vmatprep.subr.mxu0 0.0
  %915 = vmatpush1.msra.mxu0 0.0
  %916 = vmatprep.subr.mxu0 0.0
  %917 = vmatpush1.msra.mxu0 0.0
  %918 = vmatprep.subr.mxu0 0.0
  %919 = vmatpush1.msra.mxu0 0.0
  %920 = vmatprep.subr.mxu0 0.0
  %921 = vmatpush1.msra.mxu0 0.0
  %922 = vmatprep.subr.mxu0 0.0
  %923 = vmatpush1.msra.mxu0 0.0
  %924 = vmatprep.subr.mxu0 0.0
  %925 = vmatpush1.msra.mxu0 0.0
  %926 = vmatprep.subr.mxu0 0.0
  %927 = vmatpush1.msra.mxu0 0.0
  %928 = vmatprep.subr.mxu0 0.0
  %929 = vmatpush1.msra.mxu0 0.0
  %930 = vmatprep.subr.mxu0 0.0
  %931 = vmatpush1.msra.mxu0 0.0
  %932 = vmatprep.subr.mxu0 0.0
  %933 = vmatpush1.msra.mxu0 0.0
  %934 = vmatprep.subr.mxu0 0.0
  %935 = vmatpush1.msra.mxu0 0.0
  %936 = vmatprep.subr.mxu0 0.0
  %937 = vmatpush1.msra.mxu0 0.0
  %938 = vmatprep.subr.mxu0 0.0
  %939 = vmatpush1.msra.mxu0 %v909
  %940 = vmatprep.subr.mxu0 0.0
  %941 = vmatpush1.msra.mxu0 %v908
  %942 = vmatprep.subr.mxu0 0.0
  %943 = vmatpush2.msra.mxu0 0.0
  %944 = vmatprep.subr.mxu0 0.0
  %945 = vmatpush2.msra.mxu0 0.0
  %946 = vmatprep.subr.mxu0 0.0
  %947 = vmatpush2.msra.mxu0 0.0
  %948 = vmatprep.subr.mxu0 0.0
  %949 = vmatpush2.msra.mxu0 0.0
  %950 = vmatprep.subr.mxu0 0.0
  %951 = vmatpush2.msra.mxu0 0.0
  %952 = vmatprep.subr.mxu0 0.0
  %953 = vmatpush2.msra.mxu0 0.0
  %954 = vmatprep.subr.mxu0 0.0
  %955 = vmatpush2.msra.mxu0 0.0
  %956 = vmatprep.subr.mxu0 0.0
  %957 = vmatpush2.msra.mxu0 0.0
  %958 = vmatprep.subr.mxu0 0.0
  %959 = vmatpush2.msra.mxu0 0.0
  %960 = vmatprep.subr.mxu0 0.0
  %961 = vmatpush2.msra.mxu0 0.0
  %962 = vmatprep.subr.mxu0 0.0
  %963 = vmatpush2.msra.mxu0 0.0
  %964 = vmatprep.subr.mxu0 0.0
  %965 = vmatpush2.msra.mxu0 0.0
  %966 = vmatprep.subr.mxu0 0.0
  %967 = vmatpush2.msra.mxu0 0.0
  %968 = vmatprep.subr.mxu0 0.0
  %969 = vmatpush2.msra.mxu0 0.0
  %970 = vmatprep.subr.mxu0 0.0
  %971 = vmatpush2.msra.mxu0 0.0
  %972 = vmatprep.subr.mxu0 0.0
  %973 = vmatpush2.msra.mxu0 0.0
  %974 = vmatprep.mubr.f32.mxu0 0.0
  %975 = vmatmul.mubr.f32.gmra.mxu0 %v285
  %v976 = vpop.f32.mrf.mxu0
  %v977 = vadd.f32 0.0, %v976
  %v978 = vpop.f32.mrf.mxu0
  %979 = vmatprep.mubr.f32.mxu0 0.0
  %980 = vmatmul.mubr.f32.gmra.mxu0 %v288
  %v981 = vpop.f32.mrf.mxu0
  %v982 = vadd.f32 0.0, %v981
  %v983 = vpop.f32.mrf.mxu0
  %984 = vdwg.mxu0
  %985 = vmatprep.subr.mxu0 0.0
  %986 = vmatpush1.msra.mxu0 0.0
  %987 = vmatprep.subr.mxu0 0.0
  %988 = vmatpush1.msra.mxu0 0.0
  %989 = vmatprep.subr.mxu0 0.0
  %990 = vmatpush1.msra.mxu0 0.0
  %991 = vmatprep.subr.mxu0 0.0
  %992 = vmatpush1.msra.mxu0 0.0
  %993 = vmatprep.subr.mxu0 0.0
  %994 = vmatpush1.msra.mxu0 0.0
  %995 = vmatprep.subr.mxu0 0.0
  %996 = vmatpush1.msra.mxu0 0.0
  %997 = vmatprep.subr.mxu0 0.0
  %998 = vmatpush1.msra.mxu0 0.0
  %999 = vmatprep.subr.mxu0 0.0
  %1000 = vmatpush1.msra.mxu0 0.0
  %1001 = vmatprep.subr.mxu0 0.0
  %1002 = vmatpush1.msra.mxu0 0.0
  %1003 = vmatprep.subr.mxu0 0.0
  %1004 = vmatpush1.msra.mxu0 0.0
  %1005 = vmatprep.subr.mxu0 0.0
  %1006 = vmatpush1.msra.mxu0 0.0
  %1007 = vmatprep.subr.mxu0 0.0
  %1008 = vmatpush1.msra.mxu0 0.0
  %1009 = vmatprep.subr.mxu0 0.0
  %1010 = vmatpush1.msra.mxu0 0.0
  %1011 = vmatprep.subr.mxu0 0.0
  %1012 = vmatpush1.msra.mxu0 0.0
  %1013 = vmatprep.subr.mxu0 0.0
  %1014 = vmatpush1.msra.mxu0 %v909
  %1015 = vmatprep.subr.mxu0 0.0
  %1016 = vmatpush1.msra.mxu0 %v908
  %1017 = vmatprep.subr.mxu0 0.0
  %1018 = vmatpush2.msra.mxu0 0.0
  %1019 = vmatprep.subr.mxu0 0.0
  %1020 = vmatpush2.msra.mxu0 0.0
  %1021 = vmatprep.subr.mxu0 0.0
  %1022 = vmatpush2.msra.mxu0 0.0
  %1023 = vmatprep.subr.mxu0 0.0
  %1024 = vmatpush2.msra.mxu0 0.0
  %1025 = vmatprep.subr.mxu0 0.0
  %1026 = vmatpush2.msra.mxu0 0.0
  %1027 = vmatprep.subr.mxu0 0.0
  %1028 = vmatpush2.msra.mxu0 0.0
  %1029 = vmatprep.subr.mxu0 0.0
  %1030 = vmatpush2.msra.mxu0 0.0
  %1031 = vmatprep.subr.mxu0 0.0
  %1032 = vmatpush2.msra.mxu0 0.0
  %1033 = vmatprep.subr.mxu0 0.0
  %1034 = vmatpush2.msra.mxu0 0.0
  %1035 = vmatprep.subr.mxu0 0.0
  %1036 = vmatpush2.msra.mxu0 0.0
  %1037 = vmatprep.subr.mxu0 0.0
  %1038 = vmatpush2.msra.mxu0 0.0
  %1039 = vmatprep.subr.mxu0 0.0
  %1040 = vmatpush2.msra.mxu0 0.0
  %1041 = vmatprep.subr.mxu0 0.0
  %1042 = vmatpush2.msra.mxu0 0.0
  %1043 = vmatprep.subr.mxu0 0.0
  %1044 = vmatpush2.msra.mxu0 0.0
  %1045 = vmatprep.subr.mxu0 0.0
  %1046 = vmatpush2.msra.mxu0 0.0
  %1047 = vmatprep.subr.mxu0 0.0
  %1048 = vmatpush2.msra.mxu0 0.0
  %1049 = vmatprep.mubr.f32.mxu0 0.0
  %1050 = vmatmul.mubr.f32.gmra.mxu0 %v366
  %v1051 = vpop.f32.mrf.mxu0
  %v1052 = vadd.f32 0.0, %v1051
  %v1053 = vpop.f32.mrf.mxu0
  %1054 = vmatprep.mubr.f32.mxu0 0.0
  %1055 = vmatmul.mubr.f32.gmra.mxu0 %v369
  %v1056 = vpop.f32.mrf.mxu0
  %v1057 = vadd.f32 0.0, %v1056
  %v1058 = vpop.f32.mrf.mxu0
  %1059 = vdwg.mxu0
  %s1060 = scalar_lea.vmem %s1, 384
  %v1061 = vld [vmem:[%s1060] sm:$0xff]
  %v1062 = vld [vmem:[%s1060 + $0x8] sm:$0xff]
  %v1063 = vld [vmem:[%s1060 + $0x10] sm:$0xff]
  %v1064 = vld [vmem:[%s1060 + $0x18] sm:$0xff]
  %v1065 = vld [vmem:[%s1060 + $0x20] sm:$0xff]
  %v1066 = vld [vmem:[%s1060 + $0x28] sm:$0xff]
  %v1067 = vld [vmem:[%s1060 + $0x30] sm:$0xff]
  %v1068 = vld [vmem:[%s1060 + $0x38] sm:$0xff]
  %v1069 = vld [vmem:[%s1060 + $0x40] sm:$0xff]
  %v1070 = vld [vmem:[%s1060 + $0x48] sm:$0xff]
  %v1071 = vld [vmem:[%s1060 + $0x50] sm:$0xff]
  %v1072 = vld [vmem:[%s1060 + $0x58] sm:$0xff]
  %v1073 = vld [vmem:[%s1060 + $0x60] sm:$0xff]
  %v1074 = vld [vmem:[%s1060 + $0x68] sm:$0xff]
  %v1075 = vld [vmem:[%s1060 + $0x70] sm:$0xff]
  %v1076 = vld [vmem:[%s1060 + $0x78] sm:$0xff]
  %s1077 = scalar_lea.vmem %s1, 512
  %v1078 = vld [vmem:[%s1077] sm:$0xff]
  %v1079 = vld [vmem:[%s1077 + $0x8] sm:$0xff]
  %v1080 = vld [vmem:[%s1077 + $0x10] sm:$0xff]
  %v1081 = vld [vmem:[%s1077 + $0x18] sm:$0xff]
  %v1082 = vld [vmem:[%s1077 + $0x20] sm:$0xff]
  %v1083 = vld [vmem:[%s1077 + $0x28] sm:$0xff]
  %v1084 = vld [vmem:[%s1077 + $0x30] sm:$0xff]
  %v1085 = vld [vmem:[%s1077 + $0x38] sm:$0xff]
  %v1086 = vld [vmem:[%s1077 + $0x40] sm:$0xff]
  %v1087 = vld [vmem:[%s1077 + $0x48] sm:$0xff]
  %v1088 = vld [vmem:[%s1077 + $0x50] sm:$0xff]
  %v1089 = vld [vmem:[%s1077 + $0x58] sm:$0xff]
  %v1090 = vld [vmem:[%s1077 + $0x60] sm:$0xff]
  %v1091 = vld [vmem:[%s1077 + $0x68] sm:$0xff]
  %v1092 = vld [vmem:[%s1077 + $0x70] sm:$0xff]
  %v1093 = vld [vmem:[%s1077 + $0x78] sm:$0xff]
  %1094 = vmatprep.subr.mxu0 0.0
  %1095 = vmatpush1.msra.mxu0 %v1093
  %1096 = vmatprep.subr.mxu0 0.0
  %1097 = vmatpush1.msra.mxu0 %v1092
  %1098 = vmatprep.subr.mxu0 0.0
  %1099 = vmatpush1.msra.mxu0 %v1091
  %1100 = vmatprep.subr.mxu0 0.0
  %1101 = vmatpush1.msra.mxu0 %v1090
  %1102 = vmatprep.subr.mxu0 0.0
  %1103 = vmatpush1.msra.mxu0 %v1089
  %1104 = vmatprep.subr.mxu0 0.0
  %1105 = vmatpush1.msra.mxu0 %v1088
  %1106 = vmatprep.subr.mxu0 0.0
  %1107 = vmatpush1.msra.mxu0 %v1087
  %1108 = vmatprep.subr.mxu0 0.0
  %1109 = vmatpush1.msra.mxu0 %v1086
  %1110 = vmatprep.subr.mxu0 0.0
  %1111 = vmatpush1.msra.mxu0 %v1085
  %1112 = vmatprep.subr.mxu0 0.0
  %1113 = vmatpush1.msra.mxu0 %v1084
  %1114 = vmatprep.subr.mxu0 0.0
  %1115 = vmatpush1.msra.mxu0 %v1083
  %1116 = vmatprep.subr.mxu0 0.0
  %1117 = vmatpush1.msra.mxu0 %v1082
  %1118 = vmatprep.subr.mxu0 0.0
  %1119 = vmatpush1.msra.mxu0 %v1081
  %1120 = vmatprep.subr.mxu0 0.0
  %1121 = vmatpush1.msra.mxu0 %v1080
  %1122 = vmatprep.subr.mxu0 0.0
  %1123 = vmatpush1.msra.mxu0 %v1079
  %1124 = vmatprep.subr.mxu0 0.0
  %1125 = vmatpush1.msra.mxu0 %v1078
  %1126 = vmatprep.subr.mxu0 0.0
  %1127 = vmatpush2.msra.mxu0 0.0
  %1128 = vmatprep.subr.mxu0 0.0
  %1129 = vmatpush2.msra.mxu0 0.0
  %1130 = vmatprep.subr.mxu0 0.0
  %1131 = vmatpush2.msra.mxu0 0.0
  %1132 = vmatprep.subr.mxu0 0.0
  %1133 = vmatpush2.msra.mxu0 0.0
  %1134 = vmatprep.subr.mxu0 0.0
  %1135 = vmatpush2.msra.mxu0 0.0
  %1136 = vmatprep.subr.mxu0 0.0
  %1137 = vmatpush2.msra.mxu0 0.0
  %1138 = vmatprep.subr.mxu0 0.0
  %1139 = vmatpush2.msra.mxu0 0.0
  %1140 = vmatprep.subr.mxu0 0.0
  %1141 = vmatpush2.msra.mxu0 0.0
  %1142 = vmatprep.subr.mxu0 0.0
  %1143 = vmatpush2.msra.mxu0 0.0
  %1144 = vmatprep.subr.mxu0 0.0
  %1145 = vmatpush2.msra.mxu0 0.0
  %1146 = vmatprep.subr.mxu0 0.0
  %1147 = vmatpush2.msra.mxu0 0.0
  %1148 = vmatprep.subr.mxu0 0.0
  %1149 = vmatpush2.msra.mxu0 0.0
  %1150 = vmatprep.subr.mxu0 0.0
  %1151 = vmatpush2.msra.mxu0 0.0
  %1152 = vmatprep.subr.mxu0 0.0
  %1153 = vmatpush2.msra.mxu0 0.0
  %1154 = vmatprep.subr.mxu0 0.0
  %1155 = vmatpush2.msra.mxu0 0.0
  %1156 = vmatprep.subr.mxu0 0.0
  %1157 = vmatpush2.msra.mxu0 0.0
  %1158 = vmatprep.mubr.f32.mxu0 0.0
  %1159 = vmatmul.mubr.f32.gmra.mxu0 %v908
  %v1160 = vpop.f32.mrf.mxu0
  %v1161 = vadd.f32 0.0, %v1160
  %v1162 = vpop.f32.mrf.mxu0
  %1163 = vmatprep.mubr.f32.mxu0 0.0
  %1164 = vmatmul.mubr.f32.gmra.mxu0 %v909
  %v1165 = vpop.f32.mrf.mxu0
  %v1166 = vadd.f32 0.0, %v1165
  %v1167 = vpop.f32.mrf.mxu0
  %1168 = vdwg.mxu0
  %1169 = vmatprep.subr.mxu0 0.0
  %1170 = vmatpush1.msra.mxu0 %v1076
  %1171 = vmatprep.subr.mxu0 0.0
  %1172 = vmatpush1.msra.mxu0 %v1075
  %1173 = vmatprep.subr.mxu0 0.0
  %1174 = vmatpush1.msra.mxu0 %v1074
  %1175 = vmatprep.subr.mxu0 0.0
  %1176 = vmatpush1.msra.mxu0 %v1073
  %1177 = vmatprep.subr.mxu0 0.0
  %1178 = vmatpush1.msra.mxu0 %v1072
  %1179 = vmatprep.subr.mxu0 0.0
  %1180 = vmatpush1.msra.mxu0 %v1071
  %1181 = vmatprep.subr.mxu0 0.0
  %1182 = vmatpush1.msra.mxu0 %v1070
  %1183 = vmatprep.subr.mxu0 0.0
  %1184 = vmatpush1.msra.mxu0 %v1069
  %1185 = vmatprep.subr.mxu0 0.0
  %1186 = vmatpush1.msra.mxu0 %v1068
  %1187 = vmatprep.subr.mxu0 0.0
  %1188 = vmatpush1.msra.mxu0 %v1067
  %1189 = vmatprep.subr.mxu0 0.0
  %1190 = vmatpush1.msra.mxu0 %v1066
  %1191 = vmatprep.subr.mxu0 0.0
  %1192 = vmatpush1.msra.mxu0 %v1065
  %1193 = vmatprep.subr.mxu0 0.0
  %1194 = vmatpush1.msra.mxu0 %v1064
  %1195 = vmatprep.subr.mxu0 0.0
  %1196 = vmatpush1.msra.mxu0 %v1063
  %1197 = vmatprep.subr.mxu0 0.0
  %1198 = vmatpush1.msra.mxu0 %v1062
  %1199 = vmatprep.subr.mxu0 0.0
  %1200 = vmatpush1.msra.mxu0 %v1061
  %1201 = vmatprep.subr.mxu0 0.0
  %1202 = vmatpush2.msra.mxu0 0.0
  %1203 = vmatprep.subr.mxu0 0.0
  %1204 = vmatpush2.msra.mxu0 0.0
  %1205 = vmatprep.subr.mxu0 0.0
  %1206 = vmatpush2.msra.mxu0 0.0
  %1207 = vmatprep.subr.mxu0 0.0
  %1208 = vmatpush2.msra.mxu0 0.0
  %1209 = vmatprep.subr.mxu0 0.0
  %1210 = vmatpush2.msra.mxu0 0.0
  %1211 = vmatprep.subr.mxu0 0.0
  %1212 = vmatpush2.msra.mxu0 0.0
  %1213 = vmatprep.subr.mxu0 0.0
  %1214 = vmatpush2.msra.mxu0 0.0
  %1215 = vmatprep.subr.mxu0 0.0
  %1216 = vmatpush2.msra.mxu0 0.0
  %1217 = vmatprep.subr.mxu0 0.0
  %1218 = vmatpush2.msra.mxu0 0.0
  %1219 = vmatprep.subr.mxu0 0.0
  %1220 = vmatpush2.msra.mxu0 0.0
  %1221 = vmatprep.subr.mxu0 0.0
  %1222 = vmatpush2.msra.mxu0 0.0
  %1223 = vmatprep.subr.mxu0 0.0
  %1224 = vmatpush2.msra.mxu0 0.0
  %1225 = vmatprep.subr.mxu0 0.0
  %1226 = vmatpush2.msra.mxu0 0.0
  %1227 = vmatprep.subr.mxu0 0.0
  %1228 = vmatpush2.msra.mxu0 0.0
  %1229 = vmatprep.subr.mxu0 0.0
  %1230 = vmatpush2.msra.mxu0 0.0
  %1231 = vmatprep.subr.mxu0 0.0
  %1232 = vmatpush2.msra.mxu0 0.0
  %1233 = vmatprep.mubr.f32.mxu0 0.0
  %1234 = vmatmul.mubr.f32.gmra.mxu0 %v977
  %v1235 = vpop.f32.mrf.mxu0
  %v1236 = vadd.f32 %v1161, %v1235
  %v1237 = vpop.f32.mrf.mxu0
  %1238 = vmatprep.mubr.f32.mxu0 0.0
  %1239 = vmatmul.mubr.f32.gmra.mxu0 %v982
  %v1240 = vpop.f32.mrf.mxu0
  %v1241 = vadd.f32 %v1166, %v1240
  %v1242 = vpop.f32.mrf.mxu0
  %1243 = vdwg.mxu0
  %s1244 = scalar_lea.vmem %s1, 640
  %v1245 = vld [vmem:[%s1244] sm:$0xff]
  %v1246 = vld [vmem:[%s1244 + $0x8] sm:$0xff]
  %v1247 = vld [vmem:[%s1244 + $0x10] sm:$0xff]
  %v1248 = vld [vmem:[%s1244 + $0x18] sm:$0xff]
  %v1249 = vld [vmem:[%s1244 + $0x20] sm:$0xff]
  %v1250 = vld [vmem:[%s1244 + $0x28] sm:$0xff]
  %v1251 = vld [vmem:[%s1244 + $0x30] sm:$0xff]
  %v1252 = vld [vmem:[%s1244 + $0x38] sm:$0xff]
  %v1253 = vld [vmem:[%s1244 + $0x40] sm:$0xff]
  %v1254 = vld [vmem:[%s1244 + $0x48] sm:$0xff]
  %v1255 = vld [vmem:[%s1244 + $0x50] sm:$0xff]
  %v1256 = vld [vmem:[%s1244 + $0x58] sm:$0xff]
  %v1257 = vld [vmem:[%s1244 + $0x60] sm:$0xff]
  %v1258 = vld [vmem:[%s1244 + $0x68] sm:$0xff]
  %v1259 = vld [vmem:[%s1244 + $0x70] sm:$0xff]
  %v1260 = vld [vmem:[%s1244 + $0x78] sm:$0xff]
  %1261 = vmatprep.subr.mxu0 0.0
  %1262 = vmatpush1.msra.mxu0 %v1260
  %1263 = vmatprep.subr.mxu0 0.0
  %1264 = vmatpush1.msra.mxu0 %v1259
  %1265 = vmatprep.subr.mxu0 0.0
  %1266 = vmatpush1.msra.mxu0 %v1258
  %1267 = vmatprep.subr.mxu0 0.0
  %1268 = vmatpush1.msra.mxu0 %v1257
  %1269 = vmatprep.subr.mxu0 0.0
  %1270 = vmatpush1.msra.mxu0 %v1256
  %1271 = vmatprep.subr.mxu0 0.0
  %1272 = vmatpush1.msra.mxu0 %v1255
  %1273 = vmatprep.subr.mxu0 0.0
  %1274 = vmatpush1.msra.mxu0 %v1254
  %1275 = vmatprep.subr.mxu0 0.0
  %1276 = vmatpush1.msra.mxu0 %v1253
  %1277 = vmatprep.subr.mxu0 0.0
  %1278 = vmatpush1.msra.mxu0 %v1252
  %1279 = vmatprep.subr.mxu0 0.0
  %1280 = vmatpush1.msra.mxu0 %v1251
  %1281 = vmatprep.subr.mxu0 0.0
  %1282 = vmatpush1.msra.mxu0 %v1250
  %1283 = vmatprep.subr.mxu0 0.0
  %1284 = vmatpush1.msra.mxu0 %v1249
  %1285 = vmatprep.subr.mxu0 0.0
  %1286 = vmatpush1.msra.mxu0 %v1248
  %1287 = vmatprep.subr.mxu0 0.0
  %1288 = vmatpush1.msra.mxu0 %v1247
  %1289 = vmatprep.subr.mxu0 0.0
  %1290 = vmatpush1.msra.mxu0 %v1246
  %1291 = vmatprep.subr.mxu0 0.0
  %1292 = vmatpush1.msra.mxu0 %v1245
  %1293 = vmatprep.subr.mxu0 0.0
  %1294 = vmatpush2.msra.mxu0 0.0
  %1295 = vmatprep.subr.mxu0 0.0
  %1296 = vmatpush2.msra.mxu0 0.0
  %1297 = vmatprep.subr.mxu0 0.0
  %1298 = vmatpush2.msra.mxu0 0.0
  %1299 = vmatprep.subr.mxu0 0.0
  %1300 = vmatpush2.msra.mxu0 0.0
  %1301 = vmatprep.subr.mxu0 0.0
  %1302 = vmatpush2.msra.mxu0 0.0
  %1303 = vmatprep.subr.mxu0 0.0
  %1304 = vmatpush2.msra.mxu0 0.0
  %1305 = vmatprep.subr.mxu0 0.0
  %1306 = vmatpush2.msra.mxu0 0.0
  %1307 = vmatprep.subr.mxu0 0.0
  %1308 = vmatpush2.msra.mxu0 0.0
  %1309 = vmatprep.subr.mxu0 0.0
  %1310 = vmatpush2.msra.mxu0 0.0
  %1311 = vmatprep.subr.mxu0 0.0
  %1312 = vmatpush2.msra.mxu0 0.0
  %1313 = vmatprep.subr.mxu0 0.0
  %1314 = vmatpush2.msra.mxu0 0.0
  %1315 = vmatprep.subr.mxu0 0.0
  %1316 = vmatpush2.msra.mxu0 0.0
  %1317 = vmatprep.subr.mxu0 0.0
  %1318 = vmatpush2.msra.mxu0 0.0
  %1319 = vmatprep.subr.mxu0 0.0
  %1320 = vmatpush2.msra.mxu0 0.0
  %1321 = vmatprep.subr.mxu0 0.0
  %1322 = vmatpush2.msra.mxu0 0.0
  %1323 = vmatprep.subr.mxu0 0.0
  %1324 = vmatpush2.msra.mxu0 0.0
  %1325 = vmatprep.mubr.f32.mxu0 0.0
  %1326 = vmatmul.mubr.f32.gmra.mxu0 %v1052
  %v1327 = vpop.f32.mrf.mxu0
  %v1328 = vadd.f32 0.0, %v1327
  %v1329 = vpop.f32.mrf.mxu0
  %1330 = vmatprep.mubr.f32.mxu0 0.0
  %1331 = vmatmul.mubr.f32.gmra.mxu0 %v1057
  %v1332 = vpop.f32.mrf.mxu0
  %v1333 = vadd.f32 0.0, %v1332
  %v1334 = vpop.f32.mrf.mxu0
  %1335 = vdwg.mxu0
  %v1336 = vadd.f32 %v1236, %v1328
  %v1337 = vadd.f32 %v1241, %v1333
  %v1338 = vld [vmem:[%s2 + $0x3] sm:$0x1]
  %v1339 = vlaneseq
  %v1340 = vshrl.u32 %v1339, 7
  %v1341 = vsub.s32 0, %v1340
  %v1342 = vrot.slane %v1338, %v1341
  %v1343 = vadd.f32 %v1336, %v1342
  %v1344 = vadd.f32 %v1337, %v1342
  %v1345 = vld [vmem:[%s2 + $0x4] sm:$0x1]
  %v1346 = vld [vmem:[%s2 + $0x5] sm:$0x1]
  %v1347 = vadd.f32 %v1343, %v1344
  %v1348 = vrot.slane %v1347, 4
  %v1349 = vadd.f32 %v1347, %v1348
  %v1350 = vrot.slane %v1349, 2
  %v1351 = vadd.f32 %v1349, %v1350
  %v1352 = vrot.slane %v1351, 1
  %v1353 = vadd.f32 %v1351, %v1352
  %1354 = vmatprep.subr.mxu0 0.0
  %1355 = vmatpush1.msra.mxu0 %v282
  %1356 = vmatprep.subr.mxu0 0.0
  %1357 = vmatpush1.msra.mxu0 %v281
  %1358 = vmatprep.subr.mxu0 0.0
  %1359 = vmatpush1.msra.mxu0 %v280
  %1360 = vmatprep.subr.mxu0 0.0
  %1361 = vmatpush1.msra.mxu0 %v279
  %1362 = vmatprep.subr.mxu0 0.0
  %1363 = vmatpush1.msra.mxu0 %v278
  %1364 = vmatprep.subr.mxu0 0.0
  %1365 = vmatpush1.msra.mxu0 %v277
  %1366 = vmatprep.subr.mxu0 0.0
  %1367 = vmatpush1.msra.mxu0 %v276
  %1368 = vmatprep.subr.mxu0 0.0
  %1369 = vmatpush1.msra.mxu0 %v275
  %1370 = vmatprep.subr.mxu0 0.0
  %1371 = vmatpush1.msra.mxu0 %v274
  %1372 = vmatprep.subr.mxu0 0.0
  %1373 = vmatpush1.msra.mxu0 %v273
  %1374 = vmatprep.subr.mxu0 0.0
  %1375 = vmatpush1.msra.mxu0 %v272
  %1376 = vmatprep.subr.mxu0 0.0
  %1377 = vmatpush1.msra.mxu0 %v271
  %1378 = vmatprep.subr.mxu0 0.0
  %1379 = vmatpush1.msra.mxu0 %v270
  %1380 = vmatprep.subr.mxu0 0.0
  %1381 = vmatpush1.msra.mxu0 %v269
  %1382 = vmatprep.subr.mxu0 0.0
  %1383 = vmatpush1.msra.mxu0 %v268
  %1384 = vmatprep.subr.mxu0 0.0
  %1385 = vmatpush1.msra.mxu0 %v267
  %1386 = vmatprep.subr.mxu0 0.0
  %1387 = vmatpush2.msra.mxu0 0.0
  %1388 = vmatprep.subr.mxu0 0.0
  %1389 = vmatpush2.msra.mxu0 0.0
  %1390 = vmatprep.subr.mxu0 0.0
  %1391 = vmatpush2.msra.mxu0 0.0
  %1392 = vmatprep.subr.mxu0 0.0
  %1393 = vmatpush2.msra.mxu0 0.0
  %1394 = vmatprep.subr.mxu0 0.0
  %1395 = vmatpush2.msra.mxu0 0.0
  %1396 = vmatprep.subr.mxu0 0.0
  %1397 = vmatpush2.msra.mxu0 0.0
  %1398 = vmatprep.subr.mxu0 0.0
  %1399 = vmatpush2.msra.mxu0 0.0
  %1400 = vmatprep.subr.mxu0 0.0
  %1401 = vmatpush2.msra.mxu0 0.0
  %1402 = vmatprep.subr.mxu0 0.0
  %1403 = vmatpush2.msra.mxu0 0.0
  %1404 = vmatprep.subr.mxu0 0.0
  %1405 = vmatpush2.msra.mxu0 0.0
  %1406 = vmatprep.subr.mxu0 0.0
  %1407 = vmatpush2.msra.mxu0 0.0
  %1408 = vmatprep.subr.mxu0 0.0
  %1409 = vmatpush2.msra.mxu0 0.0
  %1410 = vmatprep.subr.mxu0 0.0
  %1411 = vmatpush2.msra.mxu0 0.0
  %1412 = vmatprep.subr.mxu0 0.0
  %1413 = vmatpush2.msra.mxu0 0.0
  %1414 = vmatprep.subr.mxu0 0.0
  %1415 = vmatpush2.msra.mxu0 0.0
  %1416 = vmatprep.subr.mxu0 0.0
  %1417 = vmatpush2.msra.mxu0 0.0
  %1418 = vmatprep.mubr.f32.mxu0 0.0
  %1419 = vmatmul.mubr.f32.gmra.mxu0 %v1353
  %v1420 = vpop.f32.mrf.mxu0
  %v1421 = vadd.f32 0.0, %v1420
  %v1422 = vpop.f32.mrf.mxu0
  %1423 = vdwg.mxu0
  %v1424 = vlaneseq
  %v1425 = vshrl.u32 %v1424, 7
  %v1426 = vsub.s32 0, %v1425
  %v1427 = vrot.slane %v1421, %v1426
  %v1428 = vsub.f32 %v1343, %v1427
  %v1429 = vsub.f32 %v1344, %v1427
  %v1430 = vmul.f32 %v1428, %v1428
  %v1431 = vmul.f32 %v1429, %v1429
  %v1432 = vadd.f32 %v1430, %v1431
  %v1433 = vrot.slane %v1432, 4
  %v1434 = vadd.f32 %v1432, %v1433
  %v1435 = vrot.slane %v1434, 2
  %v1436 = vadd.f32 %v1434, %v1435
  %v1437 = vrot.slane %v1436, 1
  %v1438 = vadd.f32 %v1436, %v1437
  %1439 = vmatprep.subr.mxu0 0.0
  %1440 = vmatpush1.msra.mxu0 %v282
  %1441 = vmatprep.subr.mxu0 0.0
  %1442 = vmatpush1.msra.mxu0 %v281
  %1443 = vmatprep.subr.mxu0 0.0
  %1444 = vmatpush1.msra.mxu0 %v280
  %1445 = vmatprep.subr.mxu0 0.0
  %1446 = vmatpush1.msra.mxu0 %v279
  %1447 = vmatprep.subr.mxu0 0.0
  %1448 = vmatpush1.msra.mxu0 %v278
  %1449 = vmatprep.subr.mxu0 0.0
  %1450 = vmatpush1.msra.mxu0 %v277
  %1451 = vmatprep.subr.mxu0 0.0
  %1452 = vmatpush1.msra.mxu0 %v276
  %1453 = vmatprep.subr.mxu0 0.0
  %1454 = vmatpush1.msra.mxu0 %v275
  %1455 = vmatprep.subr.mxu0 0.0
  %1456 = vmatpush1.msra.mxu0 %v274
  %1457 = vmatprep.subr.mxu0 0.0
  %1458 = vmatpush1.msra.mxu0 %v273
  %1459 = vmatprep.subr.mxu0 0.0
  %1460 = vmatpush1.msra.mxu0 %v272
  %1461 = vmatprep.subr.mxu0 0.0
  %1462 = vmatpush1.msra.mxu0 %v271
  %1463 = vmatprep.subr.mxu0 0.0
  %1464 = vmatpush1.msra.mxu0 %v270
  %1465 = vmatprep.subr.mxu0 0.0
  %1466 = vmatpush1.msra.mxu0 %v269
  %1467 = vmatprep.subr.mxu0 0.0
  %1468 = vmatpush1.msra.mxu0 %v268
  %1469 = vmatprep.subr.mxu0 0.0
  %1470 = vmatpush1.msra.mxu0 %v267
  %1471 = vmatprep.subr.mxu0 0.0
  %1472 = vmatpush2.msra.mxu0 0.0
  %1473 = vmatprep.subr.mxu0 0.0
  %1474 = vmatpush2.msra.mxu0 0.0
  %1475 = vmatprep.subr.mxu0 0.0
  %1476 = vmatpush2.msra.mxu0 0.0
  %1477 = vmatprep.subr.mxu0 0.0
  %1478 = vmatpush2.msra.mxu0 0.0
  %1479 = vmatprep.subr.mxu0 0.0
  %1480 = vmatpush2.msra.mxu0 0.0
  %1481 = vmatprep.subr.mxu0 0.0
  %1482 = vmatpush2.msra.mxu0 0.0
  %1483 = vmatprep.subr.mxu0 0.0
  %1484 = vmatpush2.msra.mxu0 0.0
  %1485 = vmatprep.subr.mxu0 0.0
  %1486 = vmatpush2.msra.mxu0 0.0
  %1487 = vmatprep.subr.mxu0 0.0
  %1488 = vmatpush2.msra.mxu0 0.0
  %1489 = vmatprep.subr.mxu0 0.0
  %1490 = vmatpush2.msra.mxu0 0.0
  %1491 = vmatprep.subr.mxu0 0.0
  %1492 = vmatpush2.msra.mxu0 0.0
  %1493 = vmatprep.subr.mxu0 0.0
  %1494 = vmatpush2.msra.mxu0 0.0
  %1495 = vmatprep.subr.mxu0 0.0
  %1496 = vmatpush2.msra.mxu0 0.0
  %1497 = vmatprep.subr.mxu0 0.0
  %1498 = vmatpush2.msra.mxu0 0.0
  %1499 = vmatprep.subr.mxu0 0.0
  %1500 = vmatpush2.msra.mxu0 0.0
  %1501 = vmatprep.subr.mxu0 0.0
  %1502 = vmatpush2.msra.mxu0 0.0
  %1503 = vmatprep.mubr.f32.mxu0 0.0
  %1504 = vmatmul.mubr.f32.gmra.mxu0 %v1438
  %v1505 = vpop.f32.mrf.mxu0
  %v1506 = vadd.f32 1e-05, %v1505
  %v1507 = vpop.f32.mrf.mxu0
  %1508 = vdwg.mxu0
  %v1509 = vrsqrt.pop %v1506
  %v1510 = vmul.f32 %v1509, %v1345
  %v1511 = vlaneseq
  %v1512 = vshrl.u32 %v1511, 7
  %v1513 = vsub.s32 0, %v1512
  %v1514 = vrot.slane %v1510, %v1513
  %v1515 = vmul.f32 %v1428, %v1514
  %v1516 = vmul.f32 %v1429, %v1514
  %v1517 = vlaneseq
  %v1518 = vshrl.u32 %v1517, 7
  %v1519 = vsub.s32 0, %v1518
  %v1520 = vrot.slane %v1346, %v1519
  %v1521 = vadd.f32 %v1515, %v1520
  %v1522 = vadd.f32 %v1516, %v1520
  %v1523 = vadd.f32 %v1521, %v14
  %v1524 = vadd.f32 %v1522, %v15
  %v1525 = vmax.f32 %v1523, 0.0
  %v1526 = vmax.f32 %v1524, 0.0
  %1527 = vst [vmem:[%s3] sm:$0xff] %v1525
  %1528 = vst [vmem:[%s3 + $0x8] sm:$0xff] %v1526
  // Predicated region
  $region14: #{residual_block.1} parent=0 // pred_check
    _
  $region15: #{residual_block.1} parent=0 // pred_check_branch
    %1530 = sbr.rel (0) target = $region17
  $region16: #{residual_block.1} parent=0 // pred_region
    _
  $region17: #{residual_block.1} parent=0 // pred_fallthru
    _
  // Predicated region
  $region18: #{residual_block.1} parent=0 // pred_check
    _
  $region19: #{residual_block.1} parent=0 // pred_check_branch
    %1532 = sbr.rel (0) target = $region21
  $region20: #{residual_block.1} parent=0 // pred_region
    _
  $region21: #{residual_block.1} parent=0 // pred_fallthru
    _

</llo_original>
